<compile_context>
chip_gen: v7x
topology: tpu7x:2x2x1
jax: 0.10.0
libtpu: 0.0.40
codegen_flags: <defaults>
</compile_context>

<pallas_src>
import functools
import math

import jax
import jax.numpy as jnp
import numpy as np
from jax import lax
from jax.experimental import pallas as pl
from jax.experimental.pallas import tpu as pltpu

BN_EPS = 1e-5


# -----------------------------------------------------------------------------
# Fused kernel:
#   in-VMEM im2col (9 static lane-shifted slices of the flat padded image)
#   -> conv-as-matmul (C,K)@(K,M) bf16->f32  + bias + ReLU
#   -> masked global-average pool via (C,M)@(M,1) matmul
#   -> per-view accumulation, then BN (eval) + mean view fusion + fc epilogue.
# Grid: (batch, view); batch is "parallel", view is "arbitrary" (reduction).
# -----------------------------------------------------------------------------
def mvrgbd_kernel(img_ref, wt_ref, cb_ref, bns_ref, bnt_ref, fwt_ref, fb_ref,
                  o_ref, acc_ref, *, H, W, num_views, chunk_m):
    # img_ref: (Cin, Lpad)  bf16 flat zero-padded image (one view of one sample)
    # wt_ref : (C, K=9*Cin) bf16 conv weight (transposed)
    # cb_ref : (C, 1) f32 conv bias;  bns_ref/bnt_ref: (C, 1) f32 BN scale/shift
    # fwt_ref: (NC, C) f32 fc weight (transposed); fb_ref: (NC, 1) f32 fc bias
    # o_ref  : (1, NC, 1) f32 logits; acc_ref: (C, 1) f32 per-sample pool accum
    Wp = W + 2
    M = H * Wp                 # output positions incl. 2 junk pad cols per row
    C = wt_ref.shape[0]
    v = pl.program_id(1)

    @pl.when(v == 0)
    def _init():
        acc_ref[...] = jnp.zeros_like(acc_ref)

    view_sum = jnp.zeros((C, 1), jnp.float32)
    for m0 in range(0, M, chunk_m):            # static chunking of the M axis
        mlen = min(chunk_m, M - m0)
        # In-VMEM im2col: tap (dy,dx) of flat position p is img[p + dy*Wp + dx].
        taps = [img_ref[:, pl.ds(m0 + dy * Wp + dx, mlen)]
                for dy in range(3) for dx in range(3)]
        p = jnp.concatenate(taps, axis=0)                         # (K, mlen) bf16
        f = jnp.dot(wt_ref[...], p,
                    preferred_element_type=jnp.float32)           # (C, mlen)
        f = jnp.maximum(f + cb_ref[...], 0.0)                     # bias + ReLU
        # 0/1 column mask that drops the 2 junk pad columns of every image row;
        # the pool is a single (C,mlen)@(mlen,1) matmul.
        pos = m0 + lax.broadcasted_iota(jnp.int32, (mlen, 1), 0)
        valid = ((pos % Wp) < W).astype(jnp.float32)              # (mlen, 1)
        view_sum = view_sum + jnp.dot(f, valid,
                                      preferred_element_type=jnp.float32)

    acc_ref[...] += view_sum * (1.0 / (H * W))                    # GAP, true H*W

    @pl.when(v == num_views - 1)
    def _finalize():
        fused = acc_ref[...] * (1.0 / num_views)                  # mean over views
        # BatchNorm1d (eval) is affine -> commutes with the view mean.
        xn = fused * bns_ref[...] + bnt_ref[...]                  # (C, 1)
        logits = jnp.dot(fwt_ref[...], xn,
                         preferred_element_type=jnp.float32) + fb_ref[...]
        o_ref[...] = logits[None]                                 # (1, NC, 1)


def _vmem_capacity_bytes():
    try:
        cap = int(pltpu.get_tpu_info().vmem_capacity_bytes)
        if cap > 0:
            return cap
    except Exception:
        pass
    return 64 << 20     # v7x per-TensorCore VMEM (smallest across v5e/v6e/v7x)


def _pad2_bytes(rows, cols, itemsize):
    """Approx VMEM bytes of a 2D buffer with (sublane,128) layout padding."""
    sub = {4: 8, 2: 16, 1: 32}.get(itemsize, 8)
    return (pl.cdiv(rows, sub) * sub) * (pl.cdiv(cols, 128) * 128) * itemsize


def run_mvrgbd(img_flat, wt, conv_b, bn_scale, bn_shift, fc_wt, fc_b, *, H, W):
    bs, V, Cin, Lpad = img_flat.shape
    C, K = wt.shape
    NC = fc_wt.shape[0]
    M = H * (W + 2)
    chunk_m = min(M, 8192)    # bounds in-kernel intermediates on any generation

    est = (2 * _pad2_bytes(Cin, Lpad, 2)                    # image block (x2 bufs)
           + 2 * (_pad2_bytes(C, K, 2) + 3 * _pad2_bytes(C, 1, 4)
                  + _pad2_bytes(NC, C, 4) + 2 * _pad2_bytes(NC, 1, 4))
           + 2 * _pad2_bytes(9 * Cin, chunk_m, 2)           # taps + concat
           + 3 * _pad2_bytes(C, chunk_m, 4)                 # conv/relu intermediates
           + _pad2_bytes(C, 1, 4)                           # accumulator scratch
           + (4 << 20))                                     # headroom
    cap = _vmem_capacity_bytes()
    vmem_limit = int(min(max(est, 32 << 20), int(0.75 * cap)))

    out = pl.pallas_call(
        functools.partial(mvrgbd_kernel, H=H, W=W, num_views=V, chunk_m=chunk_m),
        out_shape=jax.ShapeDtypeStruct((bs, NC, 1), jnp.float32),
        grid_spec=pltpu.PrefetchScalarGridSpec(
            num_scalar_prefetch=0,
            grid=(bs, V),
            in_specs=[
                pl.BlockSpec((None, None, Cin, Lpad), lambda b, v: (b, v, 0, 0)),
                pl.BlockSpec((C, K), lambda b, v: (0, 0)),
                pl.BlockSpec((C, 1), lambda b, v: (0, 0)),
                pl.BlockSpec((C, 1), lambda b, v: (0, 0)),
                pl.BlockSpec((C, 1), lambda b, v: (0, 0)),
                pl.BlockSpec((NC, C), lambda b, v: (0, 0)),
                pl.BlockSpec((NC, 1), lambda b, v: (0, 0)),
            ],
            out_specs=pl.BlockSpec((1, NC, 1), lambda b, v: (b, 0, 0)),
            scratch_shapes=[pltpu.VMEM((C, 1), jnp.float32)],
        ),
        compiler_params=pltpu.CompilerParams(
            dimension_semantics=("parallel", "arbitrary"),
            vmem_limit_bytes=vmem_limit,
        ),
    )(img_flat, wt, conv_b, bn_scale, bn_shift, fc_wt, fc_b)
    return out.reshape(bs, NC)


# -----------------------------------------------------------------------------
# Glue: parameter init, full forward, pure-jnp reference
# -----------------------------------------------------------------------------
def init_params(key, c_rgb, c_depth, out_channels, num_classes, k=3):
    k1, k2, k3, k4, k5, k6, k7, k8 = jax.random.split(key, 8)
    kk = k * k * (c_rgb + c_depth)          # fused rgb+depth conv contraction
    scale_conv = 1.0 / math.sqrt(kk)
    scale_fc = 1.0 / math.sqrt(out_channels)
    return {
        # 3x3 conv weight over concatenated [rgb, depth] channels, laid out as
        # (K, C) with K ordered (tap-major, channel-minor).
        "w_conv": jax.random.normal(k1, (kk, out_channels), jnp.float32) * scale_conv,
        "conv_b": jax.random.normal(k2, (1, out_channels), jnp.float32) * 0.01,
        # BatchNorm1d eval params / running stats (randomized slightly so the
        # BN path is actually exercised; PyTorch defaults are 1/0/0/1).
        "bn_gamma": 1.0 + 0.1 * jax.random.normal(k3, (out_channels,), jnp.float32),
        "bn_beta": 0.1 * jax.random.normal(k4, (out_channels,), jnp.float32),
        "bn_mean": 0.1 * jax.random.normal(k5, (out_channels,), jnp.float32),
        "bn_var": 1.0 + 0.1 * jnp.abs(jax.random.normal(k6, (out_channels,), jnp.float32)),
        # fc: Linear(out_channels, num_classes)
        "fc_w": jax.random.normal(k7, (out_channels, num_classes), jnp.float32) * scale_fc,
        "fc_b": jax.random.normal(k8, (1, num_classes), jnp.float32) * scale_fc,
    }


@functools.partial(jax.jit, static_argnames=("num_views",))
def multiview_rgbd_forward(x, depth, params, *, num_views):
    # x: (bs, V, 3, H, W), depth: (bs, V, 1, H, W)  -- PyTorch NCHW convention
    bs, V, _, H, W = x.shape
    Hp, Wp = H + 2, W + 2
    # Cast to bf16 BEFORE padding/flattening (4 channels, not 36 taps).
    img = jnp.concatenate([x, depth], axis=2).astype(jnp.bfloat16)  # (bs,V,4,H,W)
    img = jnp.pad(img, ((0, 0), (0, 0), (0, 0), (1, 1), (1, 1)))    # 'same' 3x3 pad
    Lp = Hp * Wp
    # Flat length must cover the largest tap offset (2*Wp+2); round to 128 lanes.
    Lpad = pl.cdiv(Lp + 2, 128) * 128
    img = img.reshape(bs, V, img.shape[2], Lp)
    img = jnp.pad(img, ((0, 0), (0, 0), (0, 0), (0, Lpad - Lp)))

    wt = params["w_conv"].astype(jnp.bfloat16).T                    # (C, K)
    cb = params["conv_b"].reshape(-1, 1)                            # (C, 1)
    bn_scale = params["bn_gamma"] * lax.rsqrt(params["bn_var"] + BN_EPS)
    bn_shift = params["bn_beta"] - params["bn_mean"] * bn_scale
    return run_mvrgbd(img, wt, cb,
                      bn_scale.reshape(-1, 1), bn_shift.reshape(-1, 1),
                      params["fc_w"].T, params["fc_b"].reshape(-1, 1),
                      H=H, W=W)                                     # (bs, NC)


def im2col(x_nhwc, k=3):
    """Reference-only 3x3 'same'-padded patches: (N,H,W,Cin)->(N,HW,k*k*Cin)."""
    N, H, W, Cin = x_nhwc.shape
    xp = jnp.pad(x_nhwc, ((0, 0), (1, 1), (1, 1), (0, 0)))
    shifts = [xp[:, dy:dy + H, dx:dx + W, :] for dy in range(k) for dx in range(k)]
    p = jnp.stack(shifts, axis=3)                  # (N, H, W, k*k, Cin)
    return p.reshape(N, H * W, k * k * Cin)


def reference_forward(x, depth, params, num_views):
    bs, V, c, H, W = x.shape
    img = jnp.concatenate([x, depth], axis=2).astype(jnp.bfloat16)
    img = img.reshape(bs * V, img.shape[2], H, W).transpose(0, 2, 3, 1)   # NHWC
    p = im2col(img)                                                        # (N,HW,36)
    w = params["w_conv"].astype(jnp.bfloat16)
    f = jnp.einsum("npk,kc->npc", p, w, preferred_element_type=jnp.float32)
    f = jnp.maximum(f + params["conv_b"], 0.0)
    feats = f.mean(axis=1)                                                 # GAP
    scale = params["bn_gamma"] * lax.rsqrt(params["bn_var"] + BN_EPS)
    bn = (feats - params["bn_mean"]) * scale + params["bn_beta"]
    fused = bn.reshape(bs, num_views, -1).mean(axis=1)
    return fused @ params["fc_w"] + params["fc_b"]


if __name__ == "__main__":
    bs, num_views, c_rgb, c_depth, H, W = 2, 3, 3, 1, 16, 16
    out_channels, num_classes = 32, 10

    key = jax.random.PRNGKey(0)
    kx, kd, kp = jax.random.split(key, 3)
    x = jax.random.normal(kx, (bs, num_views, c_rgb, H, W), jnp.float32)
    depth = jax.random.normal(kd, (bs, num_views, c_depth, H, W), jnp.float32)
    params = init_params(kp, c_rgb, c_depth, out_channels, num_classes)

    out = multiview_rgbd_forward(x, depth, params, num_views=num_views)
    out = jax.block_until_ready(out)

    ref = reference_forward(x, depth, params, num_views)
    assert out.shape == (bs, num_classes), out.shape
    np.testing.assert_allclose(np.asarray(out), np.asarray(ref),
                               rtol=1e-4, atol=2e-4)
    print("KERNEL_OK")
</pallas_src>

<mosaic_0001>
module attributes {stable_mosaic.version = 11 : i64} {
  func.func @mvrgbd_kernel(%arg0: i32, %arg1: i32, %arg2: memref<1x1x4x384xbf16, #tpu.memory_space<vmem>>, %arg3: memref<32x36xbf16, #tpu.memory_space<vmem>>, %arg4: memref<32x1xf32, #tpu.memory_space<vmem>>, %arg5: memref<32x1xf32, #tpu.memory_space<vmem>>, %arg6: memref<32x1xf32, #tpu.memory_space<vmem>>, %arg7: memref<10x32xf32, #tpu.memory_space<vmem>>, %arg8: memref<10x1xf32, #tpu.memory_space<vmem>>, %arg9: memref<1x10x1xf32, #tpu.memory_space<vmem>>, %arg10: memref<32x1xf32, #tpu.memory_space<vmem>>) attributes {dimension_semantics = [#tpu.dimension_semantics<parallel>, #tpu.dimension_semantics<arbitrary>], iteration_bounds = array<i64: 2, 3>, scalar_prefetch = 0 : i64, scratch_operands = 1 : i64, tpu.core_type = #tpu.core_type<tc>, window_params = [{transform_indices = @transform_0, window_bounds = array<i64: 1, 1, 4, 384>}, {pipeline_mode = #tpu.pipeline_mode<synchronous>, transform_indices = @transform_1, window_bounds = array<i64: 32, 36>}, {pipeline_mode = #tpu.pipeline_mode<synchronous>, transform_indices = @transform_2, window_bounds = array<i64: 32, 1>}, {pipeline_mode = #tpu.pipeline_mode<synchronous>, transform_indices = @transform_3, window_bounds = array<i64: 32, 1>}, {pipeline_mode = #tpu.pipeline_mode<synchronous>, transform_indices = @transform_4, window_bounds = array<i64: 32, 1>}, {pipeline_mode = #tpu.pipeline_mode<synchronous>, transform_indices = @transform_5, window_bounds = array<i64: 10, 32>}, {pipeline_mode = #tpu.pipeline_mode<synchronous>, transform_indices = @transform_6, window_bounds = array<i64: 10, 1>}, {transform_indices = @transform_7, window_bounds = array<i64: 1, 10, 1>}]} {
    %c0_i32 = arith.constant 0 : i32
    %0 = arith.cmpi eq, %arg1, %c0_i32 : i32
    %1 = arith.extui %0 : i1 to i32
    %c0_i32_0 = arith.constant 0 : i32
    %2 = arith.cmpi ne, %1, %c0_i32_0 : i32
    scf.if %2 {
      %cst_46 = arith.constant 0.000000e+00 : f32
      %63 = vector.broadcast %cst_46 : f32 to vector<32x1xf32>
      %c0_47 = arith.constant 0 : index
      %c0_48 = arith.constant 0 : index
      %64 = vector.load %arg10[%c0_47, %c0_48] : memref<32x1xf32, #tpu.memory_space<vmem>>, vector<32x1xf32>
      tpu.vector_store %arg10[%c0_47, %c0_48], %63 {strides = array<i32>} : memref<32x1xf32, #tpu.memory_space<vmem>>, vector<32x1xf32>,
    } else {
    }
    %cst = arith.constant 0.000000e+00 : f32
    %3 = vector.broadcast %cst : f32 to vector<32x1xf32>
    %c0 = arith.constant 0 : index
    %c0_1 = arith.constant 0 : index
    %c0_2 = arith.constant 0 : index
    %c0_3 = arith.constant 0 : index
    %4 = vector.load %arg2[%c0, %c0_1, %c0_2, %c0_3] : memref<1x1x4x384xbf16, #tpu.memory_space<vmem>>, vector<1x1x4x288xbf16>
    %5 = vector.shape_cast %4 : vector<1x1x4x288xbf16> to vector<4x288xbf16>
    %c0_4 = arith.constant 0 : index
    %c0_5 = arith.constant 0 : index
    %c0_6 = arith.constant 0 : index
    %c1 = arith.constant 1 : index
    %6 = vector.load %arg2[%c0_4, %c0_5, %c0_6, %c1] : memref<1x1x4x384xbf16, #tpu.memory_space<vmem>>, vector<1x1x4x288xbf16>
    %7 = vector.shape_cast %6 : vector<1x1x4x288xbf16> to vector<4x288xbf16>
    %c0_7 = arith.constant 0 : index
    %c0_8 = arith.constant 0 : index
    %c0_9 = arith.constant 0 : index
    %c2 = arith.constant 2 : index
    %8 = vector.load %arg2[%c0_7, %c0_8, %c0_9, %c2] : memref<1x1x4x384xbf16, #tpu.memory_space<vmem>>, vector<1x1x4x288xbf16>
    %9 = vector.shape_cast %8 : vector<1x1x4x288xbf16> to vector<4x288xbf16>
    %c0_10 = arith.constant 0 : index
    %c0_11 = arith.constant 0 : index
    %c0_12 = arith.constant 0 : index
    %c18 = arith.constant 18 : index
    %10 = vector.load %arg2[%c0_10, %c0_11, %c0_12, %c18] : memref<1x1x4x384xbf16, #tpu.memory_space<vmem>>, vector<1x1x4x288xbf16>
    %11 = vector.shape_cast %10 : vector<1x1x4x288xbf16> to vector<4x288xbf16>
    %c0_13 = arith.constant 0 : index
    %c0_14 = arith.constant 0 : index
    %c0_15 = arith.constant 0 : index
    %c19 = arith.constant 19 : index
    %12 = vector.load %arg2[%c0_13, %c0_14, %c0_15, %c19] : memref<1x1x4x384xbf16, #tpu.memory_space<vmem>>, vector<1x1x4x288xbf16>
    %13 = vector.shape_cast %12 : vector<1x1x4x288xbf16> to vector<4x288xbf16>
    %c0_16 = arith.constant 0 : index
    %c0_17 = arith.constant 0 : index
    %c0_18 = arith.constant 0 : index
    %c20 = arith.constant 20 : index
    %14 = vector.load %arg2[%c0_16, %c0_17, %c0_18, %c20] : memref<1x1x4x384xbf16, #tpu.memory_space<vmem>>, vector<1x1x4x288xbf16>
    %15 = vector.shape_cast %14 : vector<1x1x4x288xbf16> to vector<4x288xbf16>
    %c0_19 = arith.constant 0 : index
    %c0_20 = arith.constant 0 : index
    %c0_21 = arith.constant 0 : index
    %c36 = arith.constant 36 : index
    %16 = vector.load %arg2[%c0_19, %c0_20, %c0_21, %c36] : memref<1x1x4x384xbf16, #tpu.memory_space<vmem>>, vector<1x1x4x288xbf16>
    %17 = vector.shape_cast %16 : vector<1x1x4x288xbf16> to vector<4x288xbf16>
    %c0_22 = arith.constant 0 : index
    %c0_23 = arith.constant 0 : index
    %c0_24 = arith.constant 0 : index
    %c37 = arith.constant 37 : index
    %18 = vector.load %arg2[%c0_22, %c0_23, %c0_24, %c37] : memref<1x1x4x384xbf16, #tpu.memory_space<vmem>>, vector<1x1x4x288xbf16>
    %19 = vector.shape_cast %18 : vector<1x1x4x288xbf16> to vector<4x288xbf16>
    %c0_25 = arith.constant 0 : index
    %c0_26 = arith.constant 0 : index
    %c0_27 = arith.constant 0 : index
    %c38 = arith.constant 38 : index
    %20 = vector.load %arg2[%c0_25, %c0_26, %c0_27, %c38] : memref<1x1x4x384xbf16, #tpu.memory_space<vmem>>, vector<1x1x4x288xbf16>
    %21 = vector.shape_cast %20 : vector<1x1x4x288xbf16> to vector<4x288xbf16>
    %22 = tpu.concatenate %5, %7, %9, %11, %13, %15, %17, %19, %21 in 0 : vector<4x288xbf16>, vector<4x288xbf16>, vector<4x288xbf16>, vector<4x288xbf16>, vector<4x288xbf16>, vector<4x288xbf16>, vector<4x288xbf16>, vector<4x288xbf16>, vector<4x288xbf16> -> vector<36x288xbf16>
    %c0_28 = arith.constant 0 : index
    %c0_29 = arith.constant 0 : index
    %23 = vector.load %arg3[%c0_28, %c0_29] : memref<32x36xbf16, #tpu.memory_space<vmem>>, vector<32x36xbf16>
    %cst_30 = arith.constant dense<0.000000e+00> : vector<32x288xf32>
    %24 = tpu.matmul %23, %22, %cst_30 {dimension_numbers = #tpu.dot_dimension_numbers<[1], [0], [0], [1], [0, 0, 1, 1], [], []>} : vector<32x36xbf16>, vector<36x288xbf16>, vector<32x288xf32> -> vector<32x288xf32>
    %c0_31 = arith.constant 0 : index
    %c0_32 = arith.constant 0 : index
    %25 = vector.load %arg4[%c0_31, %c0_32] : memref<32x1xf32, #tpu.memory_space<vmem>>, vector<32x1xf32>
    %26 = vector.broadcast %25 : vector<32x1xf32> to vector<32x288xf32>
    %27 = arith.addf %24, %26 : vector<32x288xf32>
    %cst_33 = arith.constant 0.000000e+00 : f32
    %28 = vector.broadcast %cst_33 : f32 to vector<32x288xf32>
    %29 = arith.maximumf %27, %28 : vector<32x288xf32>
    %30 = tpu.iota {dimensions = array<i32: 0>} : vector<288x1xi32>
    %c0_i32_34 = arith.constant 0 : i32
    %31 = vector.broadcast %c0_i32_34 : i32 to vector<288x1xi32>
    %32 = arith.addi %31, %30 : vector<288x1xi32>
    %c18_i32 = arith.constant 18 : i32
    %c0_i32_35 = arith.constant 0 : i32
    %33 = arith.cmpi eq, %c18_i32, %c0_i32_35 : i32
    %c1_i32 = arith.constant 1 : i32
    %34 = arith.select %33, %c1_i32, %c18_i32 : i32
    %35 = vector.broadcast %34 : i32 to vector<288x1xi32>
    %36 = arith.remsi %32, %35 : vector<288x1xi32>
    %c0_i32_36 = arith.constant 0 : i32
    %37 = vector.broadcast %c0_i32_36 : i32 to vector<288x1xi32>
    %38 = arith.cmpi ne, %36, %37 : vector<288x1xi32>
    %c0_i32_37 = arith.constant 0 : i32
    %39 = vector.broadcast %c0_i32_37 : i32 to vector<288x1xi32>
    %40 = arith.cmpi slt, %36, %39 : vector<288x1xi32>
    %c0_i32_38 = arith.constant 0 : i32
    %41 = arith.cmpi slt, %34, %c0_i32_38 : i32
    %42 = vector.broadcast %41 : i1 to vector<288x1xi1>
    %43 = vector.broadcast %42 : vector<288x1xi1> to vector<288x1xi1>
    %44 = arith.xori %40, %43 : vector<288x1xi1>
    %45 = arith.andi %44, %38 : vector<288x1xi1>
    %46 = vector.broadcast %34 : i32 to vector<288x1xi32>
    %47 = arith.addi %36, %46 : vector<288x1xi32>
    %48 = arith.select %45, %47, %36 : vector<288x1xi1>, vector<288x1xi32>
    %c16_i32 = arith.constant 16 : i32
    %49 = vector.broadcast %c16_i32 : i32 to vector<288x1xi32>
    %50 = arith.cmpi slt, %48, %49 : vector<288x1xi32>
    %51 = arith.extui %50 : vector<288x1xi1> to vector<288x1xi32>
    %52 = arith.sitofp %51 : vector<288x1xi32> to vector<288x1xf32>
    %cst_39 = arith.constant dense<0.000000e+00> : vector<32x1xf32>
    %53 = tpu.matmul %29, %52, %cst_39 {dimension_numbers = #tpu.dot_dimension_numbers<[1], [0], [0], [1], [0, 0, 1, 1], [], []>} : vector<32x288xf32>, vector<288x1xf32>, vector<32x1xf32> -> vector<32x1xf32>
    %54 = arith.addf %3, %53 : vector<32x1xf32>
    %c0_40 = arith.constant 0 : index
    %c0_41 = arith.constant 0 : index
    %55 = vector.load %arg10[%c0_40, %c0_41] : memref<32x1xf32, #tpu.memory_space<vmem>>, vector<32x1xf32>
    %cst_42 = arith.constant 3.906250e-03 : f32
    %56 = vector.broadcast %cst_42 : f32 to vector<32x1xf32>
    %57 = arith.mulf %54, %56 : vector<32x1xf32>
    %58 = arith.addf %55, %57 : vector<32x1xf32>
    %c0_43 = arith.constant 0 : index
    %c0_44 = arith.constant 0 : index
    %59 = vector.load %arg10[%c0_43, %c0_44] : memref<32x1xf32, #tpu.memory_space<vmem>>, vector<32x1xf32>
    tpu.vector_store %arg10[%c0_43, %c0_44], %58 {strides = array<i32>} : memref<32x1xf32, #tpu.memory_space<vmem>>, vector<32x1xf32>,
    %c2_i32 = arith.constant 2 : i32
    %60 = arith.cmpi eq, %arg1, %c2_i32 : i32
    %61 = arith.extui %60 : i1 to i32
    %c0_i32_45 = arith.constant 0 : i32
    %62 = arith.cmpi ne, %61, %c0_i32_45 : i32
    scf.if %62 {
      %c0_46 = arith.constant 0 : index
      %c0_47 = arith.constant 0 : index
      %63 = vector.load %arg10[%c0_46, %c0_47] : memref<32x1xf32, #tpu.memory_space<vmem>>, vector<32x1xf32>
      %cst_48 = arith.constant 0.333333343 : f32
      %64 = vector.broadcast %cst_48 : f32 to vector<32x1xf32>
      %65 = arith.mulf %63, %64 : vector<32x1xf32>
      %c0_49 = arith.constant 0 : index
      %c0_50 = arith.constant 0 : index
      %66 = vector.load %arg5[%c0_49, %c0_50] : memref<32x1xf32, #tpu.memory_space<vmem>>, vector<32x1xf32>
      %67 = arith.mulf %65, %66 : vector<32x1xf32>
      %c0_51 = arith.constant 0 : index
      %c0_52 = arith.constant 0 : index
      %68 = vector.load %arg6[%c0_51, %c0_52] : memref<32x1xf32, #tpu.memory_space<vmem>>, vector<32x1xf32>
      %69 = arith.addf %67, %68 : vector<32x1xf32>
      %c0_53 = arith.constant 0 : index
      %c0_54 = arith.constant 0 : index
      %70 = vector.load %arg7[%c0_53, %c0_54] : memref<10x32xf32, #tpu.memory_space<vmem>>, vector<10x32xf32>
      %cst_55 = arith.constant dense<0.000000e+00> : vector<10x1xf32>
      %71 = tpu.matmul %70, %69, %cst_55 {dimension_numbers = #tpu.dot_dimension_numbers<[1], [0], [0], [1], [0, 0, 1, 1], [], []>} : vector<10x32xf32>, vector<32x1xf32>, vector<10x1xf32> -> vector<10x1xf32>
      %c0_56 = arith.constant 0 : index
      %c0_57 = arith.constant 0 : index
      %72 = vector.load %arg8[%c0_56, %c0_57] : memref<10x1xf32, #tpu.memory_space<vmem>>, vector<10x1xf32>
      %73 = arith.addf %71, %72 : vector<10x1xf32>
      %74 = vector.shape_cast %73 : vector<10x1xf32> to vector<1x10x1xf32>
      %c0_58 = arith.constant 0 : index
      %c0_59 = arith.constant 0 : index
      %c0_60 = arith.constant 0 : index
      %75 = vector.load %arg9[%c0_58, %c0_59, %c0_60] : memref<1x10x1xf32, #tpu.memory_space<vmem>>, vector<1x10x1xf32>
      tpu.vector_store %arg9[%c0_58, %c0_59, %c0_60], %74 {strides = array<i32>} : memref<1x10x1xf32, #tpu.memory_space<vmem>>, vector<1x10x1xf32>,
    } else {
    }
    return
  }
  func.func @transform_0(%arg0: i32, %arg1: i32) -> (i32, i32, i32, i32) {
    %c0_i32 = arith.constant 0 : i32
    %c0_i32_0 = arith.constant 0 : i32
    %c0_i32_1 = arith.constant 0 : i32
    return %arg0, %arg1, %c0_i32, %c0_i32_0 : i32, i32, i32, i32
  }
  func.func @transform_1(%arg0: i32, %arg1: i32) -> (i32, i32) {
    %c0_i32 = arith.constant 0 : i32
    %c0_i32_0 = arith.constant 0 : i32
    %c0_i32_1 = arith.constant 0 : i32
    return %c0_i32, %c0_i32_0 : i32, i32
  }
  func.func @transform_2(%arg0: i32, %arg1: i32) -> (i32, i32) {
    %c0_i32 = arith.constant 0 : i32
    %c0_i32_0 = arith.constant 0 : i32
    %c0_i32_1 = arith.constant 0 : i32
    return %c0_i32, %c0_i32_0 : i32, i32
  }
  func.func @transform_3(%arg0: i32, %arg1: i32) -> (i32, i32) {
    %c0_i32 = arith.constant 0 : i32
    %c0_i32_0 = arith.constant 0 : i32
    %c0_i32_1 = arith.constant 0 : i32
    return %c0_i32, %c0_i32_0 : i32, i32
  }
  func.func @transform_4(%arg0: i32, %arg1: i32) -> (i32, i32) {
    %c0_i32 = arith.constant 0 : i32
    %c0_i32_0 = arith.constant 0 : i32
    %c0_i32_1 = arith.constant 0 : i32
    return %c0_i32, %c0_i32_0 : i32, i32
  }
  func.func @transform_5(%arg0: i32, %arg1: i32) -> (i32, i32) {
    %c0_i32 = arith.constant 0 : i32
    %c0_i32_0 = arith.constant 0 : i32
    %c0_i32_1 = arith.constant 0 : i32
    return %c0_i32, %c0_i32_0 : i32, i32
  }
  func.func @transform_6(%arg0: i32, %arg1: i32) -> (i32, i32) {
    %c0_i32 = arith.constant 0 : i32
    %c0_i32_0 = arith.constant 0 : i32
    %c0_i32_1 = arith.constant 0 : i32
    return %c0_i32, %c0_i32_0 : i32, i32
  }
  func.func @transform_7(%arg0: i32, %arg1: i32) -> (i32, i32, i32) {
    %c0_i32 = arith.constant 0 : i32
    %c0_i32_0 = arith.constant 0 : i32
    %c0_i32_1 = arith.constant 0 : i32
    return %arg0, %c0_i32, %c0_i32_0 : i32, i32, i32
  }
}

</mosaic_0001>

<llo_original>
// kernel: multiview_rgbd_forward.1
$region0: #{multiview_rgbd_forward.1}
  #allocation0 [shape = 'u32[]', space=smem, size = 0x4, offset = 0x4, fixed_abs, tag = 'smem constant byte address 0x4 - core index']
  #allocation1 [shape = 'u32[144,128]{1,0:T(1,128)}', space=vmem, size = 0x12000, scoped, tag = 'internal scratch']
  #allocation2 [shape = 'f32[32,1]{1,0:T(8,128)}', space=vmem, size = 0x4000, scoped, tag = 'scratch operand']
  %s0 = inlined_call_operand.vmem [shape: bf16[2,3,4,384], index: 0, kind: input, shape index: {}]
  %s1 = inlined_call_operand.vmem [shape: bf16[32,36], index: 1, kind: input, shape index: {}]
  %s2 = inlined_call_operand.vmem [shape: f32[32,1], index: 2, kind: input, shape index: {}]
  %s3 = inlined_call_operand.vmem [shape: f32[32,1], index: 3, kind: input, shape index: {}]
  %s4 = inlined_call_operand.vmem [shape: f32[32,1], index: 4, kind: input, shape index: {}]
  %s5 = inlined_call_operand.vmem [shape: f32[10,32], index: 5, kind: input, shape index: {}]
  %s6 = inlined_call_operand.vmem [shape: f32[10,1], index: 6, kind: input, shape index: {}]
  %s7 = inlined_call_operand.vmem [shape: f32[2,10,1], index: 7, kind: output, shape index: {}]
  %s8 = sld [smem:[#allocation0]]
  $region69: #{multiview_rgbd_forward.1} parent=0
    _
  %s10 = ssub.s32 1, %s8
  %s11 = scalar_select 0, %s10, %s8
  loop: start=0, step=1, limit=8
  $region2: #{multiview_rgbd_forward.1} parent=0 // loop_pre_header
    _
  $region3: #{multiview_rgbd_forward.1} parent=0 // loop_header
    %s13 = sphi 0, %s17
    %p14 = scmp.ge.s32.totalorder %s13, 8
    %s20 = sphi 0, %s32
    %s21 = sphi 0, %s28
    %s22 = sphi 0, %s20
    %s23 = sphi 0, %s21
    %s24 = sphi 0, %s22
    %s25 = sphi 0, %s23
    %s37 = sphi 0, %s39
    %s40 = sphi 0, %s37
    %s41 = sphi 0, %s40
    %s57 = sphi 0, %s41
    %s61 = sphi 0, %s61
    %s63 = sphi 0, %s61
    %s64 = sphi 0, %s63
    %s78 = sphi 0, %s64
    %s82 = sphi 0, %s82
    %s84 = sphi 0, %s82
    %s85 = sphi 0, %s84
    %s99 = sphi 0, %s85
    %s103 = sphi 0, %s103
    %s105 = sphi 0, %s103
    %s106 = sphi 0, %s105
    %s120 = sphi 0, %s106
    %s124 = sphi 0, %s124
    %s126 = sphi 0, %s124
    %s127 = sphi 0, %s126
    %s141 = sphi 0, %s127
    %s145 = sphi 0, %s145
    %s147 = sphi 0, %s145
    %s148 = sphi 0, %s147
    %s162 = sphi 0, %s148
    %s166 = sphi 0, %s166
    %s168 = sphi 0, %s166
    %s169 = sphi 0, %s168
    %s183 = sphi 0, %s169
    %s189 = sphi 0, %s191
    %s192 = sphi 0, %s189
    %s193 = sphi 0, %s192
    %s209 = sphi 0, %s193
  $region4: #{multiview_rgbd_forward.1} parent=0 // loop_header_branch
    %16 = sbr.rel (%p14) target = $region8
  $region5: #{multiview_rgbd_forward.1} parent=0 // loop_body
    %s18 = ssub.s32 %s13, 1
    %s19 = ssub.s32 %s13, 2
    %s26 = sadd.s32 1, %s21
    %p27 = scmp.ge.s32.totalorder %s26, 3
    %s28 = scalar_select %p27, 0, %s26
    %s29 = sadd.s32 1, %s20
    %s30 = scalar_select %p27, %s29, %s20
    %p31 = scmp.ge.s32.totalorder %s30, 2
    %s32 = scalar_select %p31, 0, %s30
    %s33 = ssub.s32 %s20, %s32
    %s34 = ssub.s32 %s21, %s28
    %s35 = sor.u32 %s33, %s34
    %p36 = scmp.eq.s32.totalorder %s35, 0
    %s38 = sadd.s32 %s37, 1
    %s39 = scalar_select %p36, %s37, %s38
    %p42 = pneg %p36
    %p43 = scmp.eq.s32.totalorder %s13, 5
    %p44 = por %p42, %p43
    %p45 = scmp.ne.s32.totalorder %s37, %s40
    %p46 = scmp.eq.s32.totalorder %s13, 0
    %p47 = por %p45, %p46
    %p48 = scmp.ne.s32.totalorder %s37, %s40
    %p49 = scmp.eq.s32.totalorder %s18, 5
    %p50 = por %p48, %p49
    %p51 = scmp.ne.s32.totalorder %s40, %s41
    %p52 = scmp.eq.s32.totalorder %s18, 0
    %p53 = por %p51, %p52
    %p54 = scmp.ne.s32.totalorder %s40, %s41
    %p55 = scmp.eq.s32.totalorder %s19, 5
    %p56 = por %p54, %p55
    %p58 = scmp.ne.s32.totalorder %s41, %s57
    %p59 = scmp.eq.s32.totalorder %s19, 0
    %p60 = por %p58, %p59
    %s62 = sadd.s32 %s61, 1
    %p65 = scmp.eq.s32.totalorder %s13, 5
    %p66 = scmp.ne.s32.totalorder %s61, %s63
    %p67 = scmp.eq.s32.totalorder %s13, 0
    %p68 = por %p66, %p67
    %p69 = scmp.ne.s32.totalorder %s61, %s63
    %p70 = scmp.eq.s32.totalorder %s18, 5
    %p71 = por %p69, %p70
    %p72 = scmp.ne.s32.totalorder %s63, %s64
    %p73 = scmp.eq.s32.totalorder %s18, 0
    %p74 = por %p72, %p73
    %p75 = scmp.ne.s32.totalorder %s63, %s64
    %p76 = scmp.eq.s32.totalorder %s19, 5
    %p77 = por %p75, %p76
    %p79 = scmp.ne.s32.totalorder %s64, %s78
    %p80 = scmp.eq.s32.totalorder %s19, 0
    %p81 = por %p79, %p80
    %s83 = sadd.s32 %s82, 1
    %p86 = scmp.eq.s32.totalorder %s13, 5
    %p87 = scmp.ne.s32.totalorder %s82, %s84
    %p88 = scmp.eq.s32.totalorder %s13, 0
    %p89 = por %p87, %p88
    %p90 = scmp.ne.s32.totalorder %s82, %s84
    %p91 = scmp.eq.s32.totalorder %s18, 5
    %p92 = por %p90, %p91
    %p93 = scmp.ne.s32.totalorder %s84, %s85
    %p94 = scmp.eq.s32.totalorder %s18, 0
    %p95 = por %p93, %p94
    %p96 = scmp.ne.s32.totalorder %s84, %s85
    %p97 = scmp.eq.s32.totalorder %s19, 5
    %p98 = por %p96, %p97
    %p100 = scmp.ne.s32.totalorder %s85, %s99
    %p101 = scmp.eq.s32.totalorder %s19, 0
    %p102 = por %p100, %p101
    %s104 = sadd.s32 %s103, 1
    %p107 = scmp.eq.s32.totalorder %s13, 5
    %p108 = scmp.ne.s32.totalorder %s103, %s105
    %p109 = scmp.eq.s32.totalorder %s13, 0
    %p110 = por %p108, %p109
    %p111 = scmp.ne.s32.totalorder %s103, %s105
    %p112 = scmp.eq.s32.totalorder %s18, 5
    %p113 = por %p111, %p112
    %p114 = scmp.ne.s32.totalorder %s105, %s106
    %p115 = scmp.eq.s32.totalorder %s18, 0
    %p116 = por %p114, %p115
    %p117 = scmp.ne.s32.totalorder %s105, %s106
    %p118 = scmp.eq.s32.totalorder %s19, 5
    %p119 = por %p117, %p118
    %p121 = scmp.ne.s32.totalorder %s106, %s120
    %p122 = scmp.eq.s32.totalorder %s19, 0
    %p123 = por %p121, %p122
    %s125 = sadd.s32 %s124, 1
    %p128 = scmp.eq.s32.totalorder %s13, 5
    %p129 = scmp.ne.s32.totalorder %s124, %s126
    %p130 = scmp.eq.s32.totalorder %s13, 0
    %p131 = por %p129, %p130
    %p132 = scmp.ne.s32.totalorder %s124, %s126
    %p133 = scmp.eq.s32.totalorder %s18, 5
    %p134 = por %p132, %p133
    %p135 = scmp.ne.s32.totalorder %s126, %s127
    %p136 = scmp.eq.s32.totalorder %s18, 0
    %p137 = por %p135, %p136
    %p138 = scmp.ne.s32.totalorder %s126, %s127
    %p139 = scmp.eq.s32.totalorder %s19, 5
    %p140 = por %p138, %p139
    %p142 = scmp.ne.s32.totalorder %s127, %s141
    %p143 = scmp.eq.s32.totalorder %s19, 0
    %p144 = por %p142, %p143
    %s146 = sadd.s32 %s145, 1
    %p149 = scmp.eq.s32.totalorder %s13, 5
    %p150 = scmp.ne.s32.totalorder %s145, %s147
    %p151 = scmp.eq.s32.totalorder %s13, 0
    %p152 = por %p150, %p151
    %p153 = scmp.ne.s32.totalorder %s145, %s147
    %p154 = scmp.eq.s32.totalorder %s18, 5
    %p155 = por %p153, %p154
    %p156 = scmp.ne.s32.totalorder %s147, %s148
    %p157 = scmp.eq.s32.totalorder %s18, 0
    %p158 = por %p156, %p157
    %p159 = scmp.ne.s32.totalorder %s147, %s148
    %p160 = scmp.eq.s32.totalorder %s19, 5
    %p161 = por %p159, %p160
    %p163 = scmp.ne.s32.totalorder %s148, %s162
    %p164 = scmp.eq.s32.totalorder %s19, 0
    %p165 = por %p163, %p164
    %s167 = sadd.s32 %s166, 1
    %p170 = scmp.eq.s32.totalorder %s13, 5
    %p171 = scmp.ne.s32.totalorder %s166, %s168
    %p172 = scmp.eq.s32.totalorder %s13, 0
    %p173 = por %p171, %p172
    %p174 = scmp.ne.s32.totalorder %s166, %s168
    %p175 = scmp.eq.s32.totalorder %s18, 5
    %p176 = por %p174, %p175
    %p177 = scmp.ne.s32.totalorder %s168, %s169
    %p178 = scmp.eq.s32.totalorder %s18, 0
    %p179 = por %p177, %p178
    %p180 = scmp.ne.s32.totalorder %s168, %s169
    %p181 = scmp.eq.s32.totalorder %s19, 5
    %p182 = por %p180, %p181
    %p184 = scmp.ne.s32.totalorder %s169, %s183
    %p185 = scmp.eq.s32.totalorder %s19, 0
    %p186 = por %p184, %p185
    %s187 = ssub.s32 %s20, %s32
    %p188 = scmp.eq.s32.totalorder %s187, 0
    %s190 = sadd.s32 %s189, 1
    %s191 = scalar_select %p188, %s189, %s190
    %p194 = pneg %p188
    %p195 = scmp.eq.s32.totalorder %s13, 5
    %p196 = por %p194, %p195
    %p197 = scmp.ne.s32.totalorder %s189, %s192
    %p198 = scmp.eq.s32.totalorder %s13, 0
    %p199 = por %p197, %p198
    %p200 = scmp.ne.s32.totalorder %s189, %s192
    %p201 = scmp.eq.s32.totalorder %s18, 5
    %p202 = por %p200, %p201
    %p203 = scmp.ne.s32.totalorder %s192, %s193
    %p204 = scmp.eq.s32.totalorder %s18, 0
    %p205 = por %p203, %p204
    %p206 = scmp.ne.s32.totalorder %s192, %s193
    %p207 = scmp.eq.s32.totalorder %s19, 5
    %p208 = por %p206, %p207
    %p210 = scmp.ne.s32.totalorder %s193, %s209
    %p211 = scmp.eq.s32.totalorder %s19, 0
    %p212 = por %p210, %p211
    %p213 = scmp.le.s32.totalorder 1, %s13
    %p214 = scmp.lt.s32.totalorder %s13, 7
    %p215 = pnand %p213, %p214
    %p216 = pneg %p215
    // Predicated region
    $region9: #{multiview_rgbd_forward.1} parent=5 // pred_check
      _
    $region10: #{multiview_rgbd_forward.1} parent=5 // pred_check_branch
      %218 = sbr.rel (%p215) target = $region12
    $region11: #{multiview_rgbd_forward.1} parent=5 // pred_region
      %s219 = ssub.s32 %s13, 1
      // Predicated region
      $region13: #{multiview_rgbd_forward.1} parent=11 // pred_check
        %p220 = pneg %p74
      $region14: #{multiview_rgbd_forward.1} parent=11 // pred_check_branch
        %222 = sbr.rel (%p220) target = $region16
      $region15: #{multiview_rgbd_forward.1} parent=11 // pred_region
        _
      $region16: #{multiview_rgbd_forward.1} parent=11 // pred_fallthru
        _
      // Predicated region
      $region17: #{multiview_rgbd_forward.1} parent=11 // pred_check
        %p223 = pneg %p95
      $region18: #{multiview_rgbd_forward.1} parent=11 // pred_check_branch
        %225 = sbr.rel (%p223) target = $region20
      $region19: #{multiview_rgbd_forward.1} parent=11 // pred_region
        _
      $region20: #{multiview_rgbd_forward.1} parent=11 // pred_fallthru
        _
      // Predicated region
      $region21: #{multiview_rgbd_forward.1} parent=11 // pred_check
        %p226 = pneg %p116
      $region22: #{multiview_rgbd_forward.1} parent=11 // pred_check_branch
        %228 = sbr.rel (%p226) target = $region24
      $region23: #{multiview_rgbd_forward.1} parent=11 // pred_region
        _
      $region24: #{multiview_rgbd_forward.1} parent=11 // pred_fallthru
        _
      // Predicated region
      $region25: #{multiview_rgbd_forward.1} parent=11 // pred_check
        %p229 = pneg %p137
      $region26: #{multiview_rgbd_forward.1} parent=11 // pred_check_branch
        %231 = sbr.rel (%p229) target = $region28
      $region27: #{multiview_rgbd_forward.1} parent=11 // pred_region
        _
      $region28: #{multiview_rgbd_forward.1} parent=11 // pred_fallthru
        _
      // Predicated region
      $region29: #{multiview_rgbd_forward.1} parent=11 // pred_check
        %p232 = pneg %p158
      $region30: #{multiview_rgbd_forward.1} parent=11 // pred_check_branch
        %234 = sbr.rel (%p232) target = $region32
      $region31: #{multiview_rgbd_forward.1} parent=11 // pred_region
        _
      $region32: #{multiview_rgbd_forward.1} parent=11 // pred_fallthru
        _
      // Predicated region
      $region33: #{multiview_rgbd_forward.1} parent=11 // pred_check
        %p235 = pneg %p179
      $region34: #{multiview_rgbd_forward.1} parent=11 // pred_check_branch
        %237 = sbr.rel (%p235) target = $region36
      $region35: #{multiview_rgbd_forward.1} parent=11 // pred_region
        _
      $region36: #{multiview_rgbd_forward.1} parent=11 // pred_fallthru
        _
    $region12: #{multiview_rgbd_forward.1} parent=5 // pred_fallthru
      _
    %p238 = scmp.lt.s32.totalorder %s13, 6
    // Predicated region
    $region37: #{multiview_rgbd_forward.1} parent=5 // pred_check
      %p239 = pneg %p238
    $region38: #{multiview_rgbd_forward.1} parent=5 // pred_check_branch
      %241 = sbr.rel (%p239) target = $region40
    $region39: #{multiview_rgbd_forward.1} parent=5 // pred_region
      // Predicated region
      $region41: #{multiview_rgbd_forward.1} parent=39 // pred_check
        %p242 = pneg %p47
      $region42: #{multiview_rgbd_forward.1} parent=39 // pred_check_branch
        %244 = sbr.rel (%p242) target = $region44
      $region43: #{multiview_rgbd_forward.1} parent=39 // pred_region
        %p245 = scmp.lt.s32.totalorder %s20, 1
        %s246 = scalar_select %p245, %s20, 1
        %p247 = scmp.lt.s32.totalorder %s21, 2
        %s248 = scalar_select %p247, %s21, 2
        %s249 = smul.addr %s248, 3
        %s250 = smul.addr %s246, 9
        %s251 = sadd.s32 %s249, %s250
        %s252 = smul.addr %s251, 2
        %s253 = scalar_lea.vmem %s0, %s252
      $region44: #{multiview_rgbd_forward.1} parent=39 // pred_fallthru
        _
    $region40: #{multiview_rgbd_forward.1} parent=5 // pred_fallthru
      _
    %p254 = scmp.le.s32.totalorder 1, %s13
    %p255 = scmp.lt.s32.totalorder %s13, 7
    %p256 = pnand %p254, %p255
    %p257 = pneg %p256
    // Predicated region
    $region45: #{multiview_rgbd_forward.1} parent=5 // pred_check
      _
    $region46: #{multiview_rgbd_forward.1} parent=5 // pred_check_branch
      %259 = sbr.rel (%p256) target = $region48
    $region47: #{multiview_rgbd_forward.1} parent=5 // pred_region
      %s260 = ssub.s32 %s13, 1
      %p261 = scmp.lt.s32.totalorder %s22, 1
      %s262 = scalar_select %p261, %s22, 1
      %p263 = scmp.lt.s32.totalorder %s23, 2
      %s264 = scalar_select %p263, %s23, 2
      %s265 = smul.addr %s264, 3
      %s266 = smul.addr %s262, 9
      %s267 = sadd.s32 %s265, %s266
      %s268 = smul.addr %s267, 2
      %s269 = scalar_lea.vmem %s0, %s268
      %p270 = pneg %p53
      %p271 = pneg %p50
      %p272 = pneg %p74
      %p273 = pneg %p71
      %p274 = pneg %p95
      %p275 = pneg %p92
      %p276 = pneg %p116
      %p277 = pneg %p113
      %p278 = pneg %p137
      %p279 = pneg %p134
      %p280 = pneg %p158
      %p281 = pneg %p155
      %p282 = pneg %p179
      %p283 = pneg %p176
      %p284 = pneg %p205
      %p285 = pneg %p202
      %p286 = scmp.lt.s32.totalorder %s22, 1
      %s287 = scalar_select %p286, %s22, 1
      %s288 = smul.addr %s287, 2
      %s289 = smul.addr %s288, 8
      %s290 = scalar_lea.vmem %s7, %s289
      %p291 = scmp.lt.s32.totalorder %s22, 1
      %s292 = scalar_select %p291, %s22, 1
      %p293 = scmp.lt.s32.totalorder %s23, 2
      %s294 = scalar_select %p293, %s23, 2
      %s295 = smul.addr %s294, 3
      %s296 = smul.addr %s292, 9
      %s297 = sadd.s32 %s295, %s296
      %s298 = smul.addr %s297, 2
      %s299 = scalar_lea.vmem %s0, %s298
      %p300 = scmp.lt.s32.totalorder %s22, 1
      %s301 = scalar_select %p300, %s22, 1
      %s302 = smul.addr %s301, 2
      %s303 = smul.addr %s302, 8
      %s304 = scalar_lea.vmem %s7, %s303
      %p306 = scmp.eq.s32.totalorder %s23, 0
      // Predicated region
      $region49: #{multiview_rgbd_forward.1} parent=47 // pred_check
        %p307 = pneg %p306
      $region50: #{multiview_rgbd_forward.1} parent=47 // pred_check_branch
        %309 = sbr.rel (%p307) target = $region52
      $region51: #{multiview_rgbd_forward.1} parent=47 // pred_region
        %vm310 = vcmask 7168
        %311 = vst.msk [vmem:[#allocation2] sm:$0xff] %vm310, 0.0
        %312 = vst.msk [vmem:[#allocation2 + $0x8] sm:$0xff] %vm310, 0.0
        %313 = vst.msk [vmem:[#allocation2 + $0x10] sm:$0xff] %vm310, 0.0
        %314 = vst.msk [vmem:[#allocation2 + $0x18] sm:$0xff] %vm310, 0.0
      $region52: #{multiview_rgbd_forward.1} parent=47 // pred_fallthru
        _
      %v315 = vld [vmem:[%s299] sm:$0x3f]
      %v317 = vcombine.high %v315, %v315
      %v319 = vunpack.c.l.s4 1983009808
      %v320 = vunpack.c.0.s8 %v319
      %v321 = vlaneseq
      %v322 = vshrl.u32 %v321, 7
      %v323 = vsub.s32 %v320, %v322
      %v324 = vrot.slane %v315, %v323
      %v326 = vunpack.c.l.s4 1983009808
      %v327 = vunpack.c.0.s8 %v326
      %v328 = vlaneseq
      %v329 = vshrl.u32 %v328, 7
      %v330 = vsub.s32 %v327, %v329
      %v331 = vrot.slane %v317, %v330
      %v332 = vcombine.high %v324, %v324
      %v333 = vcombine.low %v315, %v315
      %v335 = vunpack.c.l.s4 1983009808
      %v336 = vunpack.c.0.s8 %v335
      %v337 = vlaneseq
      %v338 = vshrl.u32 %v337, 7
      %v339 = vsub.s32 %v336, %v338
      %v340 = vrot.slane %v333, %v339
      %v341 = vcombine.high %v340, %v340
      %342 = vrot.lane.b32.xlu0 %v340, 127
      %v343 = vpop.permute.xlu0 %342
      %344 = vrot.lane.b32.xlu0 %v341, 127
      %v345 = vpop.permute.xlu0 %344
      %346 = vrot.lane.b32.xlu0 %v324, 127
      %v347 = vpop.permute.xlu0 %346
      %vm348 = vcmask 1039360
      %v349 = vsel %vm348, %v343, %v345
      %v350 = vsel %vm348, %v345, %v347
      %v351 = vcombine.low %v324, %v324
      %v352 = vcombine.low %v331, %v331
      %353 = vrot.lane.b32.xlu0 %v351, 126
      %v354 = vpop.permute.xlu0 %353
      %355 = vrot.lane.b32.xlu0 %v324, 126
      %v356 = vpop.permute.xlu0 %355
      %357 = vrot.lane.b32.xlu0 %v352, 126
      %v358 = vpop.permute.xlu0 %357
      %vm359 = vcmask 1031168
      %v360 = vsel %vm359, %v354, %v356
      %v361 = vsel %vm359, %v356, %v358
      %v362 = vcombine.low %v340, %v340
      %363 = vrot.lane.b32.xlu0 %v362, 110
      %v364 = vpop.permute.xlu0 %363
      %365 = vrot.lane.b32.xlu0 %v340, 110
      %v366 = vpop.permute.xlu0 %365
      %367 = vrot.lane.b32.xlu0 %v351, 110
      %v368 = vpop.permute.xlu0 %367
      %vm369 = vcmask 900096
      %v370 = vsel %vm369, %v364, %v366
      %v371 = vsel %vm369, %v366, %v368
      %372 = vrot.lane.b32.xlu0 %v324, 109
      %v373 = vpop.permute.xlu0 %372
      %374 = vrot.lane.b32.xlu0 %v332, 109
      %v375 = vpop.permute.xlu0 %374
      %376 = vrot.lane.b32.xlu0 %v331, 109
      %v377 = vpop.permute.xlu0 %376
      %vm378 = vcmask 891904
      %v379 = vsel %vm378, %v373, %v375
      %v380 = vsel %vm378, %v375, %v377
      %381 = vrot.lane.b32.xlu0 %v340, 108
      %v382 = vpop.permute.xlu0 %381
      %383 = vrot.lane.b32.xlu0 %v341, 108
      %v384 = vpop.permute.xlu0 %383
      %385 = vrot.lane.b32.xlu0 %v324, 108
      %v386 = vpop.permute.xlu0 %385
      %vm387 = vcmask 883712
      %v388 = vsel %vm387, %v382, %v384
      %v389 = vsel %vm387, %v384, %v386
      %390 = vrot.lane.b32.xlu0 %v351, 92
      %v391 = vpop.permute.xlu0 %390
      %392 = vrot.lane.b32.xlu0 %v324, 92
      %v393 = vpop.permute.xlu0 %392
      %394 = vrot.lane.b32.xlu0 %v352, 92
      %v395 = vpop.permute.xlu0 %394
      %vm396 = vcmask 752640
      %v397 = vsel %vm396, %v391, %v393
      %v398 = vsel %vm396, %v393, %v395
      %399 = vrot.lane.b32.xlu0 %v362, 91
      %v400 = vpop.permute.xlu0 %399
      %401 = vrot.lane.b32.xlu0 %v340, 91
      %v402 = vpop.permute.xlu0 %401
      %403 = vrot.lane.b32.xlu0 %v351, 91
      %v404 = vpop.permute.xlu0 %403
      %vm405 = vcmask 744448
      %v406 = vsel %vm405, %v400, %v402
      %v407 = vsel %vm405, %v402, %v404
      %408 = vrot.lane.b32.xlu0 %v324, 90
      %v409 = vpop.permute.xlu0 %408
      %410 = vrot.lane.b32.xlu0 %v332, 90
      %v411 = vpop.permute.xlu0 %410
      %412 = vrot.lane.b32.xlu0 %v331, 90
      %v413 = vpop.permute.xlu0 %412
      %vm414 = vcmask 736256
      %v415 = vsel %vm414, %v409, %v411
      %v416 = vsel %vm414, %v411, %v413
      %vm417 = vcmask 1041408
      %v420 = vsel %vm417, %v324, %v349
      %v423 = vsel %vm417, %v332, %v350
      %v426 = vsel %vm417, %v331, %v347
      %vm427 = vcmask 1043456
      %v429 = vsel %vm427, %v420, %v360
      %v431 = vsel %vm427, %v423, %v361
      %v433 = vsel %vm427, %v426, %v358
      %vm434 = vcmask 1045504
      %v436 = vsel %vm434, %v429, %v370
      %v439 = vsel %vm434, %v431, %v371
      %v442 = vsel %vm434, %v433, %v368
      %v446 = vsel %vm417, %v379, %v388
      %v449 = vsel %vm417, %v380, %v389
      %v452 = vsel %vm417, %v377, %v386
      %v454 = vsel %vm427, %v446, %v397
      %v456 = vsel %vm427, %v449, %v398
      %v458 = vsel %vm427, %v452, %v395
      %v460 = vsel %vm434, %v454, %v406
      %v463 = vsel %vm434, %v456, %v407
      %v466 = vsel %vm434, %v458, %v404
      %v468 = vld [vmem:[%s1] sm:$0xf]
      %v469 = vld [vmem:[%s1 + $0x4] sm:$0xf]
      %v470 = vld [vmem:[%s1 + $0x8] sm:$0xf]
      %v471 = vld [vmem:[%s1 + $0xc] sm:$0xf]
      %v472 = vld [vmem:[%s2] sm:$0xff]
      %v473 = vld [vmem:[%s2 + $0x8] sm:$0xff]
      %v474 = vld [vmem:[%s2 + $0x10] sm:$0xff]
      %v475 = vld [vmem:[%s2 + $0x18] sm:$0xff]
      %477 = vset.pattern.permute.xlu0 0
      %478 = vperm.xlu0 %477, %v472
      %v479 = vpop.permute.xlu0 %478
      %482 = vset.pattern.permute.xlu0 0
      %483 = vperm.xlu0 %482, %v473
      %v484 = vpop.permute.xlu0 %483
      %487 = vset.pattern.permute.xlu0 0
      %488 = vperm.xlu0 %487, %v474
      %v489 = vpop.permute.xlu0 %488
      %492 = vset.pattern.permute.xlu0 0
      %493 = vperm.xlu0 %492, %v475
      %v494 = vpop.permute.xlu0 %493
      %v500 = vunpack.c.l.b16 %v468
      %v501 = vunpack.c.l.b16 %v469
      %v502 = vunpack.c.l.b16 %v470
      %v503 = vunpack.c.l.b16 %v471
      %v504 = vpack.c.b16 %v501, %v500
      %v505 = vpack.c.b16 %v503, %v502
      %vm506 = vcmask 293888
      %v508 = vsel %vm506, %v504, 0
      %v511 = vsel %vm506, %v505, 0
      %v514 = vsel %vm417, %v415, 0
      %v517 = vsel %vm417, %v416, 0
      %v520 = vsel %vm417, %v413, 0
      %522 = vmatprep.subr.bf16.mxu0 %v439
      %523 = vmatpush1.bf16.msra.mxu0 %v436
      %524 = vmatprep.subr.bf16.mxu0 %v463
      %525 = vmatpush1.bf16.msra.mxu0 %v460
      %526 = vmatprep.subr.bf16.mxu0 %v517
      %527 = vmatpush1.bf16.msra.mxu0 %v514
      %528 = vmatprep.subr.bf16.mxu0 0
      %529 = vmatpush1.bf16.msra.mxu0 0
      %530 = vmatprep.subr.bf16.mxu0 0
      %531 = vmatpush1.bf16.msra.mxu0 0
      %532 = vmatprep.subr.bf16.mxu0 0
      %533 = vmatpush1.bf16.msra.mxu0 0
      %534 = vmatprep.subr.bf16.mxu0 0
      %535 = vmatpush1.bf16.msra.mxu0 0
      %536 = vmatprep.subr.bf16.mxu0 0
      %537 = vmatpush1.bf16.msra.mxu0 0
      %538 = vmatprep.subr.bf16.mxu0 0
      %539 = vmatpush1.bf16.msra.mxu0 0
      %540 = vmatprep.subr.bf16.mxu0 0
      %541 = vmatpush1.bf16.msra.mxu0 0
      %542 = vmatprep.subr.bf16.mxu0 0
      %543 = vmatpush1.bf16.msra.mxu0 0
      %544 = vmatprep.subr.bf16.mxu0 0
      %545 = vmatpush1.bf16.msra.mxu0 0
      %546 = vmatprep.subr.bf16.mxu0 0
      %547 = vmatpush1.bf16.msra.mxu0 0
      %548 = vmatprep.subr.bf16.mxu0 0
      %549 = vmatpush1.bf16.msra.mxu0 0
      %550 = vmatprep.subr.bf16.mxu0 0
      %551 = vmatpush1.bf16.msra.mxu0 0
      %552 = vmatprep.subr.bf16.mxu0 0
      %553 = vmatpush1.bf16.msra.mxu0 0
      %554 = vmatprep.mubr.bf16.mxu0 0
      %555 = vmatmul.mubr.bf16.gmra.mrb[0].mxu0 %v508
      %v556 = vpop.f32.mrb[0].mxu0
      %v557 = vadd.f32 %v479, %v556
      %v558 = vpop.f32.mrb[0].mxu0
      %v559 = vadd.f32 %v479, %v558
      %v560 = vpop.f32.mrb[0].mxu0
      %v561 = vadd.f32 %v484, %v560
      %v562 = vpop.f32.mrb[0].mxu0
      %v563 = vadd.f32 %v484, %v562
      %564 = vmatprep.mubr.bf16.mxu0 0
      %565 = vmatmul.mubr.bf16.gmra.mrb[0].mxu0 %v511
      %v566 = vpop.f32.mrb[0].mxu0
      %v567 = vadd.f32 %v489, %v566
      %v568 = vpop.f32.mrb[0].mxu0
      %v569 = vadd.f32 %v489, %v568
      %v570 = vpop.f32.mrb[0].mxu0
      %v571 = vadd.f32 %v494, %v570
      %v572 = vpop.f32.mrb[0].mxu0
      %v573 = vadd.f32 %v494, %v572
      %574 = vdwg.mxu0
      %575 = vmatprep.subr.bf16.mxu0 0
      %576 = vmatpush1.bf16.msra.mxu0 %v442
      %577 = vmatprep.subr.bf16.mxu0 0
      %578 = vmatpush1.bf16.msra.mxu0 %v466
      %579 = vmatprep.subr.bf16.mxu0 0
      %580 = vmatpush1.bf16.msra.mxu0 %v520
      %581 = vmatprep.subr.bf16.mxu0 0
      %582 = vmatpush1.bf16.msra.mxu0 0
      %583 = vmatprep.subr.bf16.mxu0 0
      %584 = vmatpush1.bf16.msra.mxu0 0
      %585 = vmatprep.subr.bf16.mxu0 0
      %586 = vmatpush1.bf16.msra.mxu0 0
      %587 = vmatprep.subr.bf16.mxu0 0
      %588 = vmatpush1.bf16.msra.mxu0 0
      %589 = vmatprep.subr.bf16.mxu0 0
      %590 = vmatpush1.bf16.msra.mxu0 0
      %591 = vmatprep.subr.bf16.mxu0 0
      %592 = vmatpush1.bf16.msra.mxu0 0
      %593 = vmatprep.subr.bf16.mxu0 0
      %594 = vmatpush1.bf16.msra.mxu0 0
      %595 = vmatprep.subr.bf16.mxu0 0
      %596 = vmatpush1.bf16.msra.mxu0 0
      %597 = vmatprep.subr.bf16.mxu0 0
      %598 = vmatpush1.bf16.msra.mxu0 0
      %599 = vmatprep.subr.bf16.mxu0 0
      %600 = vmatpush1.bf16.msra.mxu0 0
      %601 = vmatprep.subr.bf16.mxu0 0
      %602 = vmatpush1.bf16.msra.mxu0 0
      %603 = vmatprep.subr.bf16.mxu0 0
      %604 = vmatpush1.bf16.msra.mxu0 0
      %605 = vmatprep.subr.bf16.mxu0 0
      %606 = vmatpush1.bf16.msra.mxu0 0
      %607 = vmatprep.mubr.bf16.mxu0 0
      %608 = vmatmul.mubr.bf16.gmra.mrb[0].mxu0 %v508
      %v609 = vpop.f32.mrb[0].mxu0
      %v610 = vadd.f32 %v479, %v609
      %v611 = vpop.f32.mrb[0].mxu0
      %v612 = vpop.f32.mrb[0].mxu0
      %v613 = vadd.f32 %v484, %v612
      %v614 = vpop.f32.mrb[0].mxu0
      %615 = vmatprep.mubr.bf16.mxu0 0
      %616 = vmatmul.mubr.bf16.gmra.mrb[0].mxu0 %v511
      %v617 = vpop.f32.mrb[0].mxu0
      %v618 = vadd.f32 %v489, %v617
      %v619 = vpop.f32.mrb[0].mxu0
      %v620 = vpop.f32.mrb[0].mxu0
      %v621 = vadd.f32 %v494, %v620
      %v622 = vpop.f32.mrb[0].mxu0
      %623 = vdwg.mxu0
      %v624 = vmax.f32 %v557, 0.0
      %v625 = vmax.f32 %v559, 0.0
      %v626 = vmax.f32 %v610, 0.0
      %v627 = vmax.f32 %v561, 0.0
      %v628 = vmax.f32 %v563, 0.0
      %v629 = vmax.f32 %v613, 0.0
      %v630 = vmax.f32 %v567, 0.0
      %v631 = vmax.f32 %v569, 0.0
      %v632 = vmax.f32 %v618, 0.0
      %v633 = vmax.f32 %v571, 0.0
      %v634 = vmax.f32 %v573, 0.0
      %v635 = vmax.f32 %v621, 0.0
      %v636 = vlaneseq
      %v637 = vshrl.u32 %v636, 7
      %v638 = vadd.s32 %v637, 8
      %v639 = vadd.s32 %v637, 16
      %v640 = vadd.s32 %v637, 24
      %v641 = vadd.s32 %v637, 32
      %v642 = vadd.s32 %v637, 40
      %v643 = vadd.s32 %v637, 48
      %v644 = vadd.s32 %v637, 56
      %v645 = vadd.s32 %v637, 64
      %v646 = vadd.s32 %v637, 72
      %v647 = vadd.s32 %v637, 80
      %v648 = vadd.s32 %v637, 88
      %v649 = vadd.s32 %v637, 96
      %v650 = vadd.s32 %v637, 104
      %v651 = vadd.s32 %v637, 112
      %v652 = vadd.s32 %v637, 120
      %v653 = vadd.s32 %v637, 128
      %v654 = vadd.s32 %v637, 136
      %v655 = vadd.s32 %v637, 144
      %v656 = vadd.s32 %v637, 152
      %v657 = vadd.s32 %v637, 160
      %v658 = vadd.s32 %v637, 168
      %v659 = vadd.s32 %v637, 176
      %v660 = vadd.s32 %v637, 184
      %v661 = vadd.s32 %v637, 192
      %v662 = vadd.s32 %v637, 200
      %v663 = vadd.s32 %v637, 208
      %v664 = vadd.s32 %v637, 216
      %v665 = vadd.s32 %v637, 224
      %v666 = vadd.s32 %v637, 232
      %v667 = vadd.s32 %v637, 240
      %v668 = vadd.s32 %v637, 248
      %v669 = vadd.s32 %v637, 256
      %v670 = vadd.s32 %v637, 264
      %v671 = vadd.s32 %v637, 272
      %v672 = vadd.s32 %v637, 280
      %vm673 = vcmp.lt.s32.totalorder %v637, 0
      %v674 = vsub.s32 0, %v637
      %v675 = vsel %vm673, %v674, %v637
      %v676 = vmul.u32.u64.compose %v675, 3817748708
      %v677 = vextract.low.u32 %v676
      %v678 = vextract.high.u32 %v676
      %v679 = vshrl.u32 %v678, 4
      %v680 = vmul.u32 %v679, 18
      %v681 = vsub.s32 %v675, %v680
      %v682 = vsub.s32 0, %v681
      %v683 = vsel %vm673, %v682, %v681
      %vm684 = vcmp.lt.s32.totalorder %v638, 0
      %v685 = vsub.s32 0, %v638
      %v686 = vsel %vm684, %v685, %v638
      %v687 = vmul.u32.u64.compose %v686, 3817748708
      %v688 = vextract.low.u32 %v687
      %v689 = vextract.high.u32 %v687
      %v690 = vshrl.u32 %v689, 4
      %v691 = vmul.u32 %v690, 18
      %v692 = vsub.s32 %v686, %v691
      %v693 = vsub.s32 0, %v692
      %v694 = vsel %vm684, %v693, %v692
      %vm695 = vcmp.lt.s32.totalorder %v639, 0
      %v696 = vsub.s32 0, %v639
      %v697 = vsel %vm695, %v696, %v639
      %v698 = vmul.u32.u64.compose %v697, 3817748708
      %v699 = vextract.low.u32 %v698
      %v700 = vextract.high.u32 %v698
      %v701 = vshrl.u32 %v700, 4
      %v702 = vmul.u32 %v701, 18
      %v703 = vsub.s32 %v697, %v702
      %v704 = vsub.s32 0, %v703
      %v705 = vsel %vm695, %v704, %v703
      %vm706 = vcmp.lt.s32.totalorder %v640, 0
      %v707 = vsub.s32 0, %v640
      %v708 = vsel %vm706, %v707, %v640
      %v709 = vmul.u32.u64.compose %v708, 3817748708
      %v710 = vextract.low.u32 %v709
      %v711 = vextract.high.u32 %v709
      %v712 = vshrl.u32 %v711, 4
      %v713 = vmul.u32 %v712, 18
      %v714 = vsub.s32 %v708, %v713
      %v715 = vsub.s32 0, %v714
      %v716 = vsel %vm706, %v715, %v714
      %vm717 = vcmp.lt.s32.totalorder %v641, 0
      %v718 = vsub.s32 0, %v641
      %v719 = vsel %vm717, %v718, %v641
      %v720 = vmul.u32.u64.compose %v719, 3817748708
      %v721 = vextract.low.u32 %v720
      %v722 = vextract.high.u32 %v720
      %v723 = vshrl.u32 %v722, 4
      %v724 = vmul.u32 %v723, 18
      %v725 = vsub.s32 %v719, %v724
      %v726 = vsub.s32 0, %v725
      %v727 = vsel %vm717, %v726, %v725
      %vm728 = vcmp.lt.s32.totalorder %v642, 0
      %v729 = vsub.s32 0, %v642
      %v730 = vsel %vm728, %v729, %v642
      %v731 = vmul.u32.u64.compose %v730, 3817748708
      %v732 = vextract.low.u32 %v731
      %v733 = vextract.high.u32 %v731
      %v734 = vshrl.u32 %v733, 4
      %v735 = vmul.u32 %v734, 18
      %v736 = vsub.s32 %v730, %v735
      %v737 = vsub.s32 0, %v736
      %v738 = vsel %vm728, %v737, %v736
      %vm739 = vcmp.lt.s32.totalorder %v643, 0
      %v740 = vsub.s32 0, %v643
      %v741 = vsel %vm739, %v740, %v643
      %v742 = vmul.u32.u64.compose %v741, 3817748708
      %v743 = vextract.low.u32 %v742
      %v744 = vextract.high.u32 %v742
      %v745 = vshrl.u32 %v744, 4
      %v746 = vmul.u32 %v745, 18
      %v747 = vsub.s32 %v741, %v746
      %v748 = vsub.s32 0, %v747
      %v749 = vsel %vm739, %v748, %v747
      %vm750 = vcmp.lt.s32.totalorder %v644, 0
      %v751 = vsub.s32 0, %v644
      %v752 = vsel %vm750, %v751, %v644
      %v753 = vmul.u32.u64.compose %v752, 3817748708
      %v754 = vextract.low.u32 %v753
      %v755 = vextract.high.u32 %v753
      %v756 = vshrl.u32 %v755, 4
      %v757 = vmul.u32 %v756, 18
      %v758 = vsub.s32 %v752, %v757
      %v759 = vsub.s32 0, %v758
      %v760 = vsel %vm750, %v759, %v758
      %vm761 = vcmp.lt.s32.totalorder %v645, 0
      %v762 = vsub.s32 0, %v645
      %v763 = vsel %vm761, %v762, %v645
      %v764 = vmul.u32.u64.compose %v763, 3817748708
      %v765 = vextract.low.u32 %v764
      %v766 = vextract.high.u32 %v764
      %v767 = vshrl.u32 %v766, 4
      %v768 = vmul.u32 %v767, 18
      %v769 = vsub.s32 %v763, %v768
      %v770 = vsub.s32 0, %v769
      %v771 = vsel %vm761, %v770, %v769
      %vm772 = vcmp.lt.s32.totalorder %v646, 0
      %v773 = vsub.s32 0, %v646
      %v774 = vsel %vm772, %v773, %v646
      %v775 = vmul.u32.u64.compose %v774, 3817748708
      %v776 = vextract.low.u32 %v775
      %v777 = vextract.high.u32 %v775
      %v778 = vshrl.u32 %v777, 4
      %v779 = vmul.u32 %v778, 18
      %v780 = vsub.s32 %v774, %v779
      %v781 = vsub.s32 0, %v780
      %v782 = vsel %vm772, %v781, %v780
      %vm783 = vcmp.lt.s32.totalorder %v647, 0
      %v784 = vsub.s32 0, %v647
      %v785 = vsel %vm783, %v784, %v647
      %v786 = vmul.u32.u64.compose %v785, 3817748708
      %v787 = vextract.low.u32 %v786
      %v788 = vextract.high.u32 %v786
      %v789 = vshrl.u32 %v788, 4
      %v790 = vmul.u32 %v789, 18
      %v791 = vsub.s32 %v785, %v790
      %v792 = vsub.s32 0, %v791
      %v793 = vsel %vm783, %v792, %v791
      %vm794 = vcmp.lt.s32.totalorder %v648, 0
      %v795 = vsub.s32 0, %v648
      %v796 = vsel %vm794, %v795, %v648
      %v797 = vmul.u32.u64.compose %v796, 3817748708
      %v798 = vextract.low.u32 %v797
      %v799 = vextract.high.u32 %v797
      %v800 = vshrl.u32 %v799, 4
      %v801 = vmul.u32 %v800, 18
      %v802 = vsub.s32 %v796, %v801
      %v803 = vsub.s32 0, %v802
      %v804 = vsel %vm794, %v803, %v802
      %vm805 = vcmp.lt.s32.totalorder %v649, 0
      %v806 = vsub.s32 0, %v649
      %v807 = vsel %vm805, %v806, %v649
      %v808 = vmul.u32.u64.compose %v807, 3817748708
      %v809 = vextract.low.u32 %v808
      %v810 = vextract.high.u32 %v808
      %v811 = vshrl.u32 %v810, 4
      %v812 = vmul.u32 %v811, 18
      %v813 = vsub.s32 %v807, %v812
      %v814 = vsub.s32 0, %v813
      %v815 = vsel %vm805, %v814, %v813
      %vm816 = vcmp.lt.s32.totalorder %v650, 0
      %v817 = vsub.s32 0, %v650
      %v818 = vsel %vm816, %v817, %v650
      %v819 = vmul.u32.u64.compose %v818, 3817748708
      %v820 = vextract.low.u32 %v819
      %v821 = vextract.high.u32 %v819
      %v822 = vshrl.u32 %v821, 4
      %v823 = vmul.u32 %v822, 18
      %v824 = vsub.s32 %v818, %v823
      %v825 = vsub.s32 0, %v824
      %v826 = vsel %vm816, %v825, %v824
      %vm827 = vcmp.lt.s32.totalorder %v651, 0
      %v828 = vsub.s32 0, %v651
      %v829 = vsel %vm827, %v828, %v651
      %v830 = vmul.u32.u64.compose %v829, 3817748708
      %v831 = vextract.low.u32 %v830
      %v832 = vextract.high.u32 %v830
      %v833 = vshrl.u32 %v832, 4
      %v834 = vmul.u32 %v833, 18
      %v835 = vsub.s32 %v829, %v834
      %v836 = vsub.s32 0, %v835
      %v837 = vsel %vm827, %v836, %v835
      %vm838 = vcmp.lt.s32.totalorder %v652, 0
      %v839 = vsub.s32 0, %v652
      %v840 = vsel %vm838, %v839, %v652
      %v841 = vmul.u32.u64.compose %v840, 3817748708
      %v842 = vextract.low.u32 %v841
      %v843 = vextract.high.u32 %v841
      %v844 = vshrl.u32 %v843, 4
      %v845 = vmul.u32 %v844, 18
      %v846 = vsub.s32 %v840, %v845
      %v847 = vsub.s32 0, %v846
      %v848 = vsel %vm838, %v847, %v846
      %vm849 = vcmp.lt.s32.totalorder %v653, 0
      %v850 = vsub.s32 0, %v653
      %v851 = vsel %vm849, %v850, %v653
      %v852 = vmul.u32.u64.compose %v851, 3817748708
      %v853 = vextract.low.u32 %v852
      %v854 = vextract.high.u32 %v852
      %v855 = vshrl.u32 %v854, 4
      %v856 = vmul.u32 %v855, 18
      %v857 = vsub.s32 %v851, %v856
      %v858 = vsub.s32 0, %v857
      %v859 = vsel %vm849, %v858, %v857
      %vm860 = vcmp.lt.s32.totalorder %v654, 0
      %v861 = vsub.s32 0, %v654
      %v862 = vsel %vm860, %v861, %v654
      %v863 = vmul.u32.u64.compose %v862, 3817748708
      %v864 = vextract.low.u32 %v863
      %v865 = vextract.high.u32 %v863
      %v866 = vshrl.u32 %v865, 4
      %v867 = vmul.u32 %v866, 18
      %v868 = vsub.s32 %v862, %v867
      %v869 = vsub.s32 0, %v868
      %v870 = vsel %vm860, %v869, %v868
      %vm871 = vcmp.lt.s32.totalorder %v655, 0
      %v872 = vsub.s32 0, %v655
      %v873 = vsel %vm871, %v872, %v655
      %v874 = vmul.u32.u64.compose %v873, 3817748708
      %v875 = vextract.low.u32 %v874
      %v876 = vextract.high.u32 %v874
      %v877 = vshrl.u32 %v876, 4
      %v878 = vmul.u32 %v877, 18
      %v879 = vsub.s32 %v873, %v878
      %v880 = vsub.s32 0, %v879
      %v881 = vsel %vm871, %v880, %v879
      %vm882 = vcmp.lt.s32.totalorder %v656, 0
      %v883 = vsub.s32 0, %v656
      %v884 = vsel %vm882, %v883, %v656
      %v885 = vmul.u32.u64.compose %v884, 3817748708
      %v886 = vextract.low.u32 %v885
      %v887 = vextract.high.u32 %v885
      %v888 = vshrl.u32 %v887, 4
      %v889 = vmul.u32 %v888, 18
      %v890 = vsub.s32 %v884, %v889
      %v891 = vsub.s32 0, %v890
      %v892 = vsel %vm882, %v891, %v890
      %vm893 = vcmp.lt.s32.totalorder %v657, 0
      %v894 = vsub.s32 0, %v657
      %v895 = vsel %vm893, %v894, %v657
      %v896 = vmul.u32.u64.compose %v895, 3817748708
      %v897 = vextract.low.u32 %v896
      %v898 = vextract.high.u32 %v896
      %v899 = vshrl.u32 %v898, 4
      %v900 = vmul.u32 %v899, 18
      %v901 = vsub.s32 %v895, %v900
      %v902 = vsub.s32 0, %v901
      %v903 = vsel %vm893, %v902, %v901
      %vm904 = vcmp.lt.s32.totalorder %v658, 0
      %v905 = vsub.s32 0, %v658
      %v906 = vsel %vm904, %v905, %v658
      %v907 = vmul.u32.u64.compose %v906, 3817748708
      %v908 = vextract.low.u32 %v907
      %v909 = vextract.high.u32 %v907
      %v910 = vshrl.u32 %v909, 4
      %v911 = vmul.u32 %v910, 18
      %v912 = vsub.s32 %v906, %v911
      %v913 = vsub.s32 0, %v912
      %v914 = vsel %vm904, %v913, %v912
      %vm915 = vcmp.lt.s32.totalorder %v659, 0
      %v916 = vsub.s32 0, %v659
      %v917 = vsel %vm915, %v916, %v659
      %v918 = vmul.u32.u64.compose %v917, 3817748708
      %v919 = vextract.low.u32 %v918
      %v920 = vextract.high.u32 %v918
      %v921 = vshrl.u32 %v920, 4
      %v922 = vmul.u32 %v921, 18
      %v923 = vsub.s32 %v917, %v922
      %v924 = vsub.s32 0, %v923
      %v925 = vsel %vm915, %v924, %v923
      %vm926 = vcmp.lt.s32.totalorder %v660, 0
      %v927 = vsub.s32 0, %v660
      %v928 = vsel %vm926, %v927, %v660
      %v929 = vmul.u32.u64.compose %v928, 3817748708
      %v930 = vextract.low.u32 %v929
      %v931 = vextract.high.u32 %v929
      %v932 = vshrl.u32 %v931, 4
      %v933 = vmul.u32 %v932, 18
      %v934 = vsub.s32 %v928, %v933
      %v935 = vsub.s32 0, %v934
      %v936 = vsel %vm926, %v935, %v934
      %vm937 = vcmp.lt.s32.totalorder %v661, 0
      %v938 = vsub.s32 0, %v661
      %v939 = vsel %vm937, %v938, %v661
      %v940 = vmul.u32.u64.compose %v939, 3817748708
      %v941 = vextract.low.u32 %v940
      %v942 = vextract.high.u32 %v940
      %v943 = vshrl.u32 %v942, 4
      %v944 = vmul.u32 %v943, 18
      %v945 = vsub.s32 %v939, %v944
      %v946 = vsub.s32 0, %v945
      %v947 = vsel %vm937, %v946, %v945
      %vm948 = vcmp.lt.s32.totalorder %v662, 0
      %v949 = vsub.s32 0, %v662
      %v950 = vsel %vm948, %v949, %v662
      %v951 = vmul.u32.u64.compose %v950, 3817748708
      %v952 = vextract.low.u32 %v951
      %v953 = vextract.high.u32 %v951
      %v954 = vshrl.u32 %v953, 4
      %v955 = vmul.u32 %v954, 18
      %v956 = vsub.s32 %v950, %v955
      %v957 = vsub.s32 0, %v956
      %v958 = vsel %vm948, %v957, %v956
      %vm959 = vcmp.lt.s32.totalorder %v663, 0
      %v960 = vsub.s32 0, %v663
      %v961 = vsel %vm959, %v960, %v663
      %v962 = vmul.u32.u64.compose %v961, 3817748708
      %v963 = vextract.low.u32 %v962
      %v964 = vextract.high.u32 %v962
      %v965 = vshrl.u32 %v964, 4
      %v966 = vmul.u32 %v965, 18
      %v967 = vsub.s32 %v961, %v966
      %v968 = vsub.s32 0, %v967
      %v969 = vsel %vm959, %v968, %v967
      %vm970 = vcmp.lt.s32.totalorder %v664, 0
      %v971 = vsub.s32 0, %v664
      %v972 = vsel %vm970, %v971, %v664
      %v973 = vmul.u32.u64.compose %v972, 3817748708
      %v974 = vextract.low.u32 %v973
      %v975 = vextract.high.u32 %v973
      %v976 = vshrl.u32 %v975, 4
      %v977 = vmul.u32 %v976, 18
      %v978 = vsub.s32 %v972, %v977
      %v979 = vsub.s32 0, %v978
      %v980 = vsel %vm970, %v979, %v978
      %vm981 = vcmp.lt.s32.totalorder %v665, 0
      %v982 = vsub.s32 0, %v665
      %v983 = vsel %vm981, %v982, %v665
      %v984 = vmul.u32.u64.compose %v983, 3817748708
      %v985 = vextract.low.u32 %v984
      %v986 = vextract.high.u32 %v984
      %v987 = vshrl.u32 %v986, 4
      %v988 = vmul.u32 %v987, 18
      %v989 = vsub.s32 %v983, %v988
      %v990 = vsub.s32 0, %v989
      %v991 = vsel %vm981, %v990, %v989
      %vm992 = vcmp.lt.s32.totalorder %v666, 0
      %v993 = vsub.s32 0, %v666
      %v994 = vsel %vm992, %v993, %v666
      %v995 = vmul.u32.u64.compose %v994, 3817748708
      %v996 = vextract.low.u32 %v995
      %v997 = vextract.high.u32 %v995
      %v998 = vshrl.u32 %v997, 4
      %v999 = vmul.u32 %v998, 18
      %v1000 = vsub.s32 %v994, %v999
      %v1001 = vsub.s32 0, %v1000
      %v1002 = vsel %vm992, %v1001, %v1000
      %vm1003 = vcmp.lt.s32.totalorder %v667, 0
      %v1004 = vsub.s32 0, %v667
      %v1005 = vsel %vm1003, %v1004, %v667
      %v1006 = vmul.u32.u64.compose %v1005, 3817748708
      %v1007 = vextract.low.u32 %v1006
      %v1008 = vextract.high.u32 %v1006
      %v1009 = vshrl.u32 %v1008, 4
      %v1010 = vmul.u32 %v1009, 18
      %v1011 = vsub.s32 %v1005, %v1010
      %v1012 = vsub.s32 0, %v1011
      %v1013 = vsel %vm1003, %v1012, %v1011
      %vm1014 = vcmp.lt.s32.totalorder %v668, 0
      %v1015 = vsub.s32 0, %v668
      %v1016 = vsel %vm1014, %v1015, %v668
      %v1017 = vmul.u32.u64.compose %v1016, 3817748708
      %v1018 = vextract.low.u32 %v1017
      %v1019 = vextract.high.u32 %v1017
      %v1020 = vshrl.u32 %v1019, 4
      %v1021 = vmul.u32 %v1020, 18
      %v1022 = vsub.s32 %v1016, %v1021
      %v1023 = vsub.s32 0, %v1022
      %v1024 = vsel %vm1014, %v1023, %v1022
      %vm1025 = vcmp.lt.s32.totalorder %v669, 0
      %v1026 = vsub.s32 0, %v669
      %v1027 = vsel %vm1025, %v1026, %v669
      %v1028 = vmul.u32.u64.compose %v1027, 3817748708
      %v1029 = vextract.low.u32 %v1028
      %v1030 = vextract.high.u32 %v1028
      %v1031 = vshrl.u32 %v1030, 4
      %v1032 = vmul.u32 %v1031, 18
      %v1033 = vsub.s32 %v1027, %v1032
      %v1034 = vsub.s32 0, %v1033
      %v1035 = vsel %vm1025, %v1034, %v1033
      %vm1036 = vcmp.lt.s32.totalorder %v670, 0
      %v1037 = vsub.s32 0, %v670
      %v1038 = vsel %vm1036, %v1037, %v670
      %v1039 = vmul.u32.u64.compose %v1038, 3817748708
      %v1040 = vextract.low.u32 %v1039
      %v1041 = vextract.high.u32 %v1039
      %v1042 = vshrl.u32 %v1041, 4
      %v1043 = vmul.u32 %v1042, 18
      %v1044 = vsub.s32 %v1038, %v1043
      %v1045 = vsub.s32 0, %v1044
      %v1046 = vsel %vm1036, %v1045, %v1044
      %vm1047 = vcmp.lt.s32.totalorder %v671, 0
      %v1048 = vsub.s32 0, %v671
      %v1049 = vsel %vm1047, %v1048, %v671
      %v1050 = vmul.u32.u64.compose %v1049, 3817748708
      %v1051 = vextract.low.u32 %v1050
      %v1052 = vextract.high.u32 %v1050
      %v1053 = vshrl.u32 %v1052, 4
      %v1054 = vmul.u32 %v1053, 18
      %v1055 = vsub.s32 %v1049, %v1054
      %v1056 = vsub.s32 0, %v1055
      %v1057 = vsel %vm1047, %v1056, %v1055
      %vm1058 = vcmp.lt.s32.totalorder %v672, 0
      %v1059 = vsub.s32 0, %v672
      %v1060 = vsel %vm1058, %v1059, %v672
      %v1061 = vmul.u32.u64.compose %v1060, 3817748708
      %v1062 = vextract.low.u32 %v1061
      %v1063 = vextract.high.u32 %v1061
      %v1064 = vshrl.u32 %v1063, 4
      %v1065 = vmul.u32 %v1064, 18
      %v1066 = vsub.s32 %v1060, %v1065
      %v1067 = vsub.s32 0, %v1066
      %v1068 = vsel %vm1058, %v1067, %v1066
      %vm1069 = vcmp.ne.s32.totalorder %v683, 0
      %vm1070 = vcmp.ne.s32.totalorder %v694, 0
      %vm1071 = vcmp.ne.s32.totalorder %v705, 0
      %vm1072 = vcmp.ne.s32.totalorder %v716, 0
      %vm1073 = vcmp.ne.s32.totalorder %v727, 0
      %vm1074 = vcmp.ne.s32.totalorder %v738, 0
      %vm1075 = vcmp.ne.s32.totalorder %v749, 0
      %vm1076 = vcmp.ne.s32.totalorder %v760, 0
      %vm1077 = vcmp.ne.s32.totalorder %v771, 0
      %vm1078 = vcmp.ne.s32.totalorder %v782, 0
      %vm1079 = vcmp.ne.s32.totalorder %v793, 0
      %vm1080 = vcmp.ne.s32.totalorder %v804, 0
      %vm1081 = vcmp.ne.s32.totalorder %v815, 0
      %vm1082 = vcmp.ne.s32.totalorder %v826, 0
      %vm1083 = vcmp.ne.s32.totalorder %v837, 0
      %vm1084 = vcmp.ne.s32.totalorder %v848, 0
      %vm1085 = vcmp.ne.s32.totalorder %v859, 0
      %vm1086 = vcmp.ne.s32.totalorder %v870, 0
      %vm1087 = vcmp.ne.s32.totalorder %v881, 0
      %vm1088 = vcmp.ne.s32.totalorder %v892, 0
      %vm1089 = vcmp.ne.s32.totalorder %v903, 0
      %vm1090 = vcmp.ne.s32.totalorder %v914, 0
      %vm1091 = vcmp.ne.s32.totalorder %v925, 0
      %vm1092 = vcmp.ne.s32.totalorder %v936, 0
      %vm1093 = vcmp.ne.s32.totalorder %v947, 0
      %vm1094 = vcmp.ne.s32.totalorder %v958, 0
      %vm1095 = vcmp.ne.s32.totalorder %v969, 0
      %vm1096 = vcmp.ne.s32.totalorder %v980, 0
      %vm1097 = vcmp.ne.s32.totalorder %v991, 0
      %vm1098 = vcmp.ne.s32.totalorder %v1002, 0
      %vm1099 = vcmp.ne.s32.totalorder %v1013, 0
      %vm1100 = vcmp.ne.s32.totalorder %v1024, 0
      %vm1101 = vcmp.ne.s32.totalorder %v1035, 0
      %vm1102 = vcmp.ne.s32.totalorder %v1046, 0
      %vm1103 = vcmp.ne.s32.totalorder %v1057, 0
      %vm1104 = vcmp.ne.s32.totalorder %v1068, 0
      %vm1105 = vcmp.lt.s32.totalorder %v683, 0
      %vm1106 = vcmp.lt.s32.totalorder %v694, 0
      %vm1107 = vcmp.lt.s32.totalorder %v705, 0
      %vm1108 = vcmp.lt.s32.totalorder %v716, 0
      %vm1109 = vcmp.lt.s32.totalorder %v727, 0
      %vm1110 = vcmp.lt.s32.totalorder %v738, 0
      %vm1111 = vcmp.lt.s32.totalorder %v749, 0
      %vm1112 = vcmp.lt.s32.totalorder %v760, 0
      %vm1113 = vcmp.lt.s32.totalorder %v771, 0
      %vm1114 = vcmp.lt.s32.totalorder %v782, 0
      %vm1115 = vcmp.lt.s32.totalorder %v793, 0
      %vm1116 = vcmp.lt.s32.totalorder %v804, 0
      %vm1117 = vcmp.lt.s32.totalorder %v815, 0
      %vm1118 = vcmp.lt.s32.totalorder %v826, 0
      %vm1119 = vcmp.lt.s32.totalorder %v837, 0
      %vm1120 = vcmp.lt.s32.totalorder %v848, 0
      %vm1121 = vcmp.lt.s32.totalorder %v859, 0
      %vm1122 = vcmp.lt.s32.totalorder %v870, 0
      %vm1123 = vcmp.lt.s32.totalorder %v881, 0
      %vm1124 = vcmp.lt.s32.totalorder %v892, 0
      %vm1125 = vcmp.lt.s32.totalorder %v903, 0
      %vm1126 = vcmp.lt.s32.totalorder %v914, 0
      %vm1127 = vcmp.lt.s32.totalorder %v925, 0
      %vm1128 = vcmp.lt.s32.totalorder %v936, 0
      %vm1129 = vcmp.lt.s32.totalorder %v947, 0
      %vm1130 = vcmp.lt.s32.totalorder %v958, 0
      %vm1131 = vcmp.lt.s32.totalorder %v969, 0
      %vm1132 = vcmp.lt.s32.totalorder %v980, 0
      %vm1133 = vcmp.lt.s32.totalorder %v991, 0
      %vm1134 = vcmp.lt.s32.totalorder %v1002, 0
      %vm1135 = vcmp.lt.s32.totalorder %v1013, 0
      %vm1136 = vcmp.lt.s32.totalorder %v1024, 0
      %vm1137 = vcmp.lt.s32.totalorder %v1035, 0
      %vm1138 = vcmp.lt.s32.totalorder %v1046, 0
      %vm1139 = vcmp.lt.s32.totalorder %v1057, 0
      %vm1140 = vcmp.lt.s32.totalorder %v1068, 0
      %vm1141 = vmand %vm1105, %vm1069
      %vm1142 = vmand %vm1106, %vm1070
      %vm1143 = vmand %vm1107, %vm1071
      %vm1144 = vmand %vm1108, %vm1072
      %vm1145 = vmand %vm1109, %vm1073
      %vm1146 = vmand %vm1110, %vm1074
      %vm1147 = vmand %vm1111, %vm1075
      %vm1148 = vmand %vm1112, %vm1076
      %vm1149 = vmand %vm1113, %vm1077
      %vm1150 = vmand %vm1114, %vm1078
      %vm1151 = vmand %vm1115, %vm1079
      %vm1152 = vmand %vm1116, %vm1080
      %vm1153 = vmand %vm1117, %vm1081
      %vm1154 = vmand %vm1118, %vm1082
      %vm1155 = vmand %vm1119, %vm1083
      %vm1156 = vmand %vm1120, %vm1084
      %vm1157 = vmand %vm1121, %vm1085
      %vm1158 = vmand %vm1122, %vm1086
      %vm1159 = vmand %vm1123, %vm1087
      %vm1160 = vmand %vm1124, %vm1088
      %vm1161 = vmand %vm1125, %vm1089
      %vm1162 = vmand %vm1126, %vm1090
      %vm1163 = vmand %vm1127, %vm1091
      %vm1164 = vmand %vm1128, %vm1092
      %vm1165 = vmand %vm1129, %vm1093
      %vm1166 = vmand %vm1130, %vm1094
      %vm1167 = vmand %vm1131, %vm1095
      %vm1168 = vmand %vm1132, %vm1096
      %vm1169 = vmand %vm1133, %vm1097
      %vm1170 = vmand %vm1134, %vm1098
      %vm1171 = vmand %vm1135, %vm1099
      %vm1172 = vmand %vm1136, %vm1100
      %vm1173 = vmand %vm1137, %vm1101
      %vm1174 = vmand %vm1138, %vm1102
      %vm1175 = vmand %vm1139, %vm1103
      %vm1176 = vmand %vm1140, %vm1104
      %v1177 = vadd.s32 %v683, 18
      %v1178 = vadd.s32 %v694, 18
      %v1179 = vadd.s32 %v705, 18
      %v1180 = vadd.s32 %v716, 18
      %v1181 = vadd.s32 %v727, 18
      %v1182 = vadd.s32 %v738, 18
      %v1183 = vadd.s32 %v749, 18
      %v1184 = vadd.s32 %v760, 18
      %v1185 = vadd.s32 %v771, 18
      %v1186 = vadd.s32 %v782, 18
      %v1187 = vadd.s32 %v793, 18
      %v1188 = vadd.s32 %v804, 18
      %v1189 = vadd.s32 %v815, 18
      %v1190 = vadd.s32 %v826, 18
      %v1191 = vadd.s32 %v837, 18
      %v1192 = vadd.s32 %v848, 18
      %v1193 = vadd.s32 %v859, 18
      %v1194 = vadd.s32 %v870, 18
      %v1195 = vadd.s32 %v881, 18
      %v1196 = vadd.s32 %v892, 18
      %v1197 = vadd.s32 %v903, 18
      %v1198 = vadd.s32 %v914, 18
      %v1199 = vadd.s32 %v925, 18
      %v1200 = vadd.s32 %v936, 18
      %v1201 = vadd.s32 %v947, 18
      %v1202 = vadd.s32 %v958, 18
      %v1203 = vadd.s32 %v969, 18
      %v1204 = vadd.s32 %v980, 18
      %v1205 = vadd.s32 %v991, 18
      %v1206 = vadd.s32 %v1002, 18
      %v1207 = vadd.s32 %v1013, 18
      %v1208 = vadd.s32 %v1024, 18
      %v1209 = vadd.s32 %v1035, 18
      %v1210 = vadd.s32 %v1046, 18
      %v1211 = vadd.s32 %v1057, 18
      %v1212 = vadd.s32 %v1068, 18
      %v1213 = vsel %vm1141, %v1177, %v683
      %v1214 = vsel %vm1142, %v1178, %v694
      %v1215 = vsel %vm1143, %v1179, %v705
      %v1216 = vsel %vm1144, %v1180, %v716
      %v1217 = vsel %vm1145, %v1181, %v727
      %v1218 = vsel %vm1146, %v1182, %v738
      %v1219 = vsel %vm1147, %v1183, %v749
      %v1220 = vsel %vm1148, %v1184, %v760
      %v1221 = vsel %vm1149, %v1185, %v771
      %v1222 = vsel %vm1150, %v1186, %v782
      %v1223 = vsel %vm1151, %v1187, %v793
      %v1224 = vsel %vm1152, %v1188, %v804
      %v1225 = vsel %vm1153, %v1189, %v815
      %v1226 = vsel %vm1154, %v1190, %v826
      %v1227 = vsel %vm1155, %v1191, %v837
      %v1228 = vsel %vm1156, %v1192, %v848
      %v1229 = vsel %vm1157, %v1193, %v859
      %v1230 = vsel %vm1158, %v1194, %v870
      %v1231 = vsel %vm1159, %v1195, %v881
      %v1232 = vsel %vm1160, %v1196, %v892
      %v1233 = vsel %vm1161, %v1197, %v903
      %v1234 = vsel %vm1162, %v1198, %v914
      %v1235 = vsel %vm1163, %v1199, %v925
      %v1236 = vsel %vm1164, %v1200, %v936
      %v1237 = vsel %vm1165, %v1201, %v947
      %v1238 = vsel %vm1166, %v1202, %v958
      %v1239 = vsel %vm1167, %v1203, %v969
      %v1240 = vsel %vm1168, %v1204, %v980
      %v1241 = vsel %vm1169, %v1205, %v991
      %v1242 = vsel %vm1170, %v1206, %v1002
      %v1243 = vsel %vm1171, %v1207, %v1013
      %v1244 = vsel %vm1172, %v1208, %v1024
      %v1245 = vsel %vm1173, %v1209, %v1035
      %v1246 = vsel %vm1174, %v1210, %v1046
      %v1247 = vsel %vm1175, %v1211, %v1057
      %v1248 = vsel %vm1176, %v1212, %v1068
      %vm1249 = vcmp.lt.s32.totalorder %v1213, 16
      %vm1250 = vcmp.lt.s32.totalorder %v1214, 16
      %vm1251 = vcmp.lt.s32.totalorder %v1215, 16
      %vm1252 = vcmp.lt.s32.totalorder %v1216, 16
      %vm1253 = vcmp.lt.s32.totalorder %v1217, 16
      %vm1254 = vcmp.lt.s32.totalorder %v1218, 16
      %vm1255 = vcmp.lt.s32.totalorder %v1219, 16
      %vm1256 = vcmp.lt.s32.totalorder %v1220, 16
      %vm1257 = vcmp.lt.s32.totalorder %v1221, 16
      %vm1258 = vcmp.lt.s32.totalorder %v1222, 16
      %vm1259 = vcmp.lt.s32.totalorder %v1223, 16
      %vm1260 = vcmp.lt.s32.totalorder %v1224, 16
      %vm1261 = vcmp.lt.s32.totalorder %v1225, 16
      %vm1262 = vcmp.lt.s32.totalorder %v1226, 16
      %vm1263 = vcmp.lt.s32.totalorder %v1227, 16
      %vm1264 = vcmp.lt.s32.totalorder %v1228, 16
      %vm1265 = vcmp.lt.s32.totalorder %v1229, 16
      %vm1266 = vcmp.lt.s32.totalorder %v1230, 16
      %vm1267 = vcmp.lt.s32.totalorder %v1231, 16
      %vm1268 = vcmp.lt.s32.totalorder %v1232, 16
      %vm1269 = vcmp.lt.s32.totalorder %v1233, 16
      %vm1270 = vcmp.lt.s32.totalorder %v1234, 16
      %vm1271 = vcmp.lt.s32.totalorder %v1235, 16
      %vm1272 = vcmp.lt.s32.totalorder %v1236, 16
      %vm1273 = vcmp.lt.s32.totalorder %v1237, 16
      %vm1274 = vcmp.lt.s32.totalorder %v1238, 16
      %vm1275 = vcmp.lt.s32.totalorder %v1239, 16
      %vm1276 = vcmp.lt.s32.totalorder %v1240, 16
      %vm1277 = vcmp.lt.s32.totalorder %v1241, 16
      %vm1278 = vcmp.lt.s32.totalorder %v1242, 16
      %vm1279 = vcmp.lt.s32.totalorder %v1243, 16
      %vm1280 = vcmp.lt.s32.totalorder %v1244, 16
      %vm1281 = vcmp.lt.s32.totalorder %v1245, 16
      %vm1282 = vcmp.lt.s32.totalorder %v1246, 16
      %vm1283 = vcmp.lt.s32.totalorder %v1247, 16
      %vm1284 = vcmp.lt.s32.totalorder %v1248, 16
      %v1285 = vsel %vm1249, 1, 0
      %v1286 = vsel %vm1250, 1, 0
      %v1287 = vsel %vm1251, 1, 0
      %v1288 = vsel %vm1252, 1, 0
      %v1289 = vsel %vm1253, 1, 0
      %v1290 = vsel %vm1254, 1, 0
      %v1291 = vsel %vm1255, 1, 0
      %v1292 = vsel %vm1256, 1, 0
      %v1293 = vsel %vm1257, 1, 0
      %v1294 = vsel %vm1258, 1, 0
      %v1295 = vsel %vm1259, 1, 0
      %v1296 = vsel %vm1260, 1, 0
      %v1297 = vsel %vm1261, 1, 0
      %v1298 = vsel %vm1262, 1, 0
      %v1299 = vsel %vm1263, 1, 0
      %v1300 = vsel %vm1264, 1, 0
      %v1301 = vsel %vm1265, 1, 0
      %v1302 = vsel %vm1266, 1, 0
      %v1303 = vsel %vm1267, 1, 0
      %v1304 = vsel %vm1268, 1, 0
      %v1305 = vsel %vm1269, 1, 0
      %v1306 = vsel %vm1270, 1, 0
      %v1307 = vsel %vm1271, 1, 0
      %v1308 = vsel %vm1272, 1, 0
      %v1309 = vsel %vm1273, 1, 0
      %v1310 = vsel %vm1274, 1, 0
      %v1311 = vsel %vm1275, 1, 0
      %v1312 = vsel %vm1276, 1, 0
      %v1313 = vsel %vm1277, 1, 0
      %v1314 = vsel %vm1278, 1, 0
      %v1315 = vsel %vm1279, 1, 0
      %v1316 = vsel %vm1280, 1, 0
      %v1317 = vsel %vm1281, 1, 0
      %v1318 = vsel %vm1282, 1, 0
      %v1319 = vsel %vm1283, 1, 0
      %v1320 = vsel %vm1284, 1, 0
      %v1321 = vcvt.s32.f32 %v1285
      %v1322 = vcvt.s32.f32 %v1286
      %v1323 = vcvt.s32.f32 %v1287
      %v1324 = vcvt.s32.f32 %v1288
      %v1325 = vcvt.s32.f32 %v1289
      %v1326 = vcvt.s32.f32 %v1290
      %v1327 = vcvt.s32.f32 %v1291
      %v1328 = vcvt.s32.f32 %v1292
      %v1329 = vcvt.s32.f32 %v1293
      %v1330 = vcvt.s32.f32 %v1294
      %v1331 = vcvt.s32.f32 %v1295
      %v1332 = vcvt.s32.f32 %v1296
      %v1333 = vcvt.s32.f32 %v1297
      %v1334 = vcvt.s32.f32 %v1298
      %v1335 = vcvt.s32.f32 %v1299
      %v1336 = vcvt.s32.f32 %v1300
      %v1337 = vcvt.s32.f32 %v1301
      %v1338 = vcvt.s32.f32 %v1302
      %v1339 = vcvt.s32.f32 %v1303
      %v1340 = vcvt.s32.f32 %v1304
      %v1341 = vcvt.s32.f32 %v1305
      %v1342 = vcvt.s32.f32 %v1306
      %v1343 = vcvt.s32.f32 %v1307
      %v1344 = vcvt.s32.f32 %v1308
      %v1345 = vcvt.s32.f32 %v1309
      %v1346 = vcvt.s32.f32 %v1310
      %v1347 = vcvt.s32.f32 %v1311
      %v1348 = vcvt.s32.f32 %v1312
      %v1349 = vcvt.s32.f32 %v1313
      %v1350 = vcvt.s32.f32 %v1314
      %v1351 = vcvt.s32.f32 %v1315
      %v1352 = vcvt.s32.f32 %v1316
      %v1353 = vcvt.s32.f32 %v1317
      %v1354 = vcvt.s32.f32 %v1318
      %v1355 = vcvt.s32.f32 %v1319
      %v1356 = vcvt.s32.f32 %v1320
      %vm1357 = vcmask 261120
      %v1359 = vsel %vm1357, %v626, 0
      %v1362 = vsel %vm1357, %v629, 0
      %v1365 = vsel %vm1357, %v632, 0
      %v1368 = vsel %vm1357, %v635, 0
      %1370 = vmatprep.subr.mxu0 0.0
      %1371 = vmatpush1.msra.mxu0 %v1321
      %1372 = vmatprep.subr.mxu0 0.0
      %1373 = vmatpush1.msra.mxu0 %v1322
      %1374 = vmatprep.subr.mxu0 0.0
      %1375 = vmatpush1.msra.mxu0 %v1323
      %1376 = vmatprep.subr.mxu0 0.0
      %1377 = vmatpush1.msra.mxu0 %v1324
      %1378 = vmatprep.subr.mxu0 0.0
      %1379 = vmatpush1.msra.mxu0 %v1325
      %1380 = vmatprep.subr.mxu0 0.0
      %1381 = vmatpush1.msra.mxu0 %v1326
      %1382 = vmatprep.subr.mxu0 0.0
      %1383 = vmatpush1.msra.mxu0 %v1327
      %1384 = vmatprep.subr.mxu0 0.0
      %1385 = vmatpush1.msra.mxu0 %v1328
      %1386 = vmatprep.subr.mxu0 0.0
      %1387 = vmatpush1.msra.mxu0 %v1329
      %1388 = vmatprep.subr.mxu0 0.0
      %1389 = vmatpush1.msra.mxu0 %v1330
      %1390 = vmatprep.subr.mxu0 0.0
      %1391 = vmatpush1.msra.mxu0 %v1331
      %1392 = vmatprep.subr.mxu0 0.0
      %1393 = vmatpush1.msra.mxu0 %v1332
      %1394 = vmatprep.subr.mxu0 0.0
      %1395 = vmatpush1.msra.mxu0 %v1333
      %1396 = vmatprep.subr.mxu0 0.0
      %1397 = vmatpush1.msra.mxu0 %v1334
      %1398 = vmatprep.subr.mxu0 0.0
      %1399 = vmatpush1.msra.mxu0 %v1335
      %1400 = vmatprep.subr.mxu0 0.0
      %1401 = vmatpush1.msra.mxu0 %v1336
      %1402 = vmatprep.subr.mxu0 0.0
      %1403 = vmatpush1.msra.mxu0 %v1337
      %1404 = vmatprep.subr.mxu0 0.0
      %1405 = vmatpush1.msra.mxu0 %v1338
      %1406 = vmatprep.subr.mxu0 0.0
      %1407 = vmatpush1.msra.mxu0 %v1339
      %1408 = vmatprep.subr.mxu0 0.0
      %1409 = vmatpush1.msra.mxu0 %v1340
      %1410 = vmatprep.subr.mxu0 0.0
      %1411 = vmatpush1.msra.mxu0 %v1341
      %1412 = vmatprep.subr.mxu0 0.0
      %1413 = vmatpush1.msra.mxu0 %v1342
      %1414 = vmatprep.subr.mxu0 0.0
      %1415 = vmatpush1.msra.mxu0 %v1343
      %1416 = vmatprep.subr.mxu0 0.0
      %1417 = vmatpush1.msra.mxu0 %v1344
      %1418 = vmatprep.subr.mxu0 0.0
      %1419 = vmatpush1.msra.mxu0 %v1345
      %1420 = vmatprep.subr.mxu0 0.0
      %1421 = vmatpush1.msra.mxu0 %v1346
      %1422 = vmatprep.subr.mxu0 0.0
      %1423 = vmatpush1.msra.mxu0 %v1347
      %1424 = vmatprep.subr.mxu0 0.0
      %1425 = vmatpush1.msra.mxu0 %v1348
      %1426 = vmatprep.subr.mxu0 0.0
      %1427 = vmatpush1.msra.mxu0 %v1349
      %1428 = vmatprep.subr.mxu0 0.0
      %1429 = vmatpush1.msra.mxu0 %v1350
      %1430 = vmatprep.subr.mxu0 0.0
      %1431 = vmatpush1.msra.mxu0 %v1351
      %1432 = vmatprep.subr.mxu0 0.0
      %1433 = vmatpush1.msra.mxu0 %v1352
      %1434 = vmatprep.mubr.f32.mxu0 %v625
      %1435 = vmatmul.mubr.f32.gmra.mrb[0].mxu0 %v624
      %v1436 = vpop.f32.mrb[0].mxu0
      %v1437 = vadd.f32 0.0, %v1436
      %v1438 = vpop.f32.mrb[0].mxu0
      %1439 = vmatprep.mubr.f32.mxu0 %v628
      %1440 = vmatmul.mubr.f32.gmra.mrb[0].mxu0 %v627
      %v1441 = vpop.f32.mrb[0].mxu0
      %v1442 = vadd.f32 0.0, %v1441
      %v1443 = vpop.f32.mrb[0].mxu0
      %1444 = vmatprep.mubr.f32.mxu0 %v631
      %1445 = vmatmul.mubr.f32.gmra.mrb[0].mxu0 %v630
      %v1446 = vpop.f32.mrb[0].mxu0
      %v1447 = vadd.f32 0.0, %v1446
      %v1448 = vpop.f32.mrb[0].mxu0
      %1449 = vmatprep.mubr.f32.mxu0 %v634
      %1450 = vmatmul.mubr.f32.gmra.mrb[0].mxu0 %v633
      %v1451 = vpop.f32.mrb[0].mxu0
      %v1452 = vadd.f32 0.0, %v1451
      %v1453 = vpop.f32.mrb[0].mxu0
      %1454 = vdwg.mxu0
      %1455 = vmatprep.subr.mxu0 0.0
      %1456 = vmatpush1.msra.mxu0 %v1353
      %1457 = vmatprep.subr.mxu0 0.0
      %1458 = vmatpush1.msra.mxu0 %v1354
      %1459 = vmatprep.subr.mxu0 0.0
      %1460 = vmatpush1.msra.mxu0 %v1355
      %1461 = vmatprep.subr.mxu0 0.0
      %1462 = vmatpush1.msra.mxu0 %v1356
      %1463 = vmatprep.subr.mxu0 0.0
      %1464 = vmatpush1.msra.mxu0 0.0
      %1465 = vmatprep.subr.mxu0 0.0
      %1466 = vmatpush1.msra.mxu0 0.0
      %1467 = vmatprep.subr.mxu0 0.0
      %1468 = vmatpush1.msra.mxu0 0.0
      %1469 = vmatprep.subr.mxu0 0.0
      %1470 = vmatpush1.msra.mxu0 0.0
      %1471 = vmatprep.subr.mxu0 0.0
      %1472 = vmatpush1.msra.mxu0 0.0
      %1473 = vmatprep.subr.mxu0 0.0
      %1474 = vmatpush1.msra.mxu0 0.0
      %1475 = vmatprep.subr.mxu0 0.0
      %1476 = vmatpush1.msra.mxu0 0.0
      %1477 = vmatprep.subr.mxu0 0.0
      %1478 = vmatpush1.msra.mxu0 0.0
      %1479 = vmatprep.subr.mxu0 0.0
      %1480 = vmatpush1.msra.mxu0 0.0
      %1481 = vmatprep.subr.mxu0 0.0
      %1482 = vmatpush1.msra.mxu0 0.0
      %1483 = vmatprep.subr.mxu0 0.0
      %1484 = vmatpush1.msra.mxu0 0.0
      %1485 = vmatprep.subr.mxu0 0.0
      %1486 = vmatpush1.msra.mxu0 0.0
      %1487 = vmatprep.subr.mxu0 0.0
      %1488 = vmatpush1.msra.mxu0 0.0
      %1489 = vmatprep.subr.mxu0 0.0
      %1490 = vmatpush1.msra.mxu0 0.0
      %1491 = vmatprep.subr.mxu0 0.0
      %1492 = vmatpush1.msra.mxu0 0.0
      %1493 = vmatprep.subr.mxu0 0.0
      %1494 = vmatpush1.msra.mxu0 0.0
      %1495 = vmatprep.subr.mxu0 0.0
      %1496 = vmatpush1.msra.mxu0 0.0
      %1497 = vmatprep.subr.mxu0 0.0
      %1498 = vmatpush1.msra.mxu0 0.0
      %1499 = vmatprep.subr.mxu0 0.0
      %1500 = vmatpush1.msra.mxu0 0.0
      %1501 = vmatprep.subr.mxu0 0.0
      %1502 = vmatpush1.msra.mxu0 0.0
      %1503 = vmatprep.subr.mxu0 0.0
      %1504 = vmatpush1.msra.mxu0 0.0
      %1505 = vmatprep.subr.mxu0 0.0
      %1506 = vmatpush1.msra.mxu0 0.0
      %1507 = vmatprep.subr.mxu0 0.0
      %1508 = vmatpush1.msra.mxu0 0.0
      %1509 = vmatprep.subr.mxu0 0.0
      %1510 = vmatpush1.msra.mxu0 0.0
      %1511 = vmatprep.subr.mxu0 0.0
      %1512 = vmatpush1.msra.mxu0 0.0
      %1513 = vmatprep.subr.mxu0 0.0
      %1514 = vmatpush1.msra.mxu0 0.0
      %1515 = vmatprep.subr.mxu0 0.0
      %1516 = vmatpush1.msra.mxu0 0.0
      %1517 = vmatprep.subr.mxu0 0.0
      %1518 = vmatpush1.msra.mxu0 0.0
      %1519 = vmatprep.mubr.f32.mxu0 0.0
      %1520 = vmatmul.mubr.f32.gmra.mrb[0].mxu0 %v1359
      %v1521 = vpop.f32.mrb[0].mxu0
      %v1522 = vadd.f32 %v1437, %v1521
      %v1523 = vpop.f32.mrb[0].mxu0
      %1524 = vmatprep.mubr.f32.mxu0 0.0
      %1525 = vmatmul.mubr.f32.gmra.mrb[0].mxu0 %v1362
      %v1526 = vpop.f32.mrb[0].mxu0
      %v1527 = vadd.f32 %v1442, %v1526
      %v1528 = vpop.f32.mrb[0].mxu0
      %1529 = vmatprep.mubr.f32.mxu0 0.0
      %1530 = vmatmul.mubr.f32.gmra.mrb[0].mxu0 %v1365
      %v1531 = vpop.f32.mrb[0].mxu0
      %v1532 = vadd.f32 %v1447, %v1531
      %v1533 = vpop.f32.mrb[0].mxu0
      %1534 = vmatprep.mubr.f32.mxu0 0.0
      %1535 = vmatmul.mubr.f32.gmra.mrb[0].mxu0 %v1368
      %v1536 = vpop.f32.mrb[0].mxu0
      %v1537 = vadd.f32 %v1452, %v1536
      %v1538 = vpop.f32.mrb[0].mxu0
      %1539 = vdwg.mxu0
      %v1540 = vld [vmem:[#allocation2] sm:$0xff]
      %v1541 = vld [vmem:[#allocation2 + $0x8] sm:$0xff]
      %v1542 = vld [vmem:[#allocation2 + $0x10] sm:$0xff]
      %v1543 = vld [vmem:[#allocation2 + $0x18] sm:$0xff]
      %v1544 = vmul.f32 %v1522, 0.00390625
      %v1545 = vmul.f32 %v1527, 0.00390625
      %v1546 = vmul.f32 %v1532, 0.00390625
      %v1547 = vmul.f32 %v1537, 0.00390625
      %v1548 = vadd.f32 %v1540, %v1544
      %v1549 = vadd.f32 %v1541, %v1545
      %v1550 = vadd.f32 %v1542, %v1546
      %v1551 = vadd.f32 %v1543, %v1547
      %vm1552 = vcmask 7168
      %1553 = vst.msk [vmem:[#allocation2] sm:$0xff] %vm1552, %v1548
      %1554 = vst.msk [vmem:[#allocation2 + $0x8] sm:$0xff] %vm1552, %v1549
      %1555 = vst.msk [vmem:[#allocation2 + $0x10] sm:$0xff] %vm1552, %v1550
      %1556 = vst.msk [vmem:[#allocation2 + $0x18] sm:$0xff] %vm1552, %v1551
      %p1557 = scmp.eq.s32.totalorder %s23, 2
      // Predicated region
      $region53: #{multiview_rgbd_forward.1} parent=47 // pred_check
        %p1558 = pneg %p1557
      $region54: #{multiview_rgbd_forward.1} parent=47 // pred_check_branch
        %1560 = sbr.rel (%p1558) target = $region56
      $region55: #{multiview_rgbd_forward.1} parent=47 // pred_region
        %v1561 = vld [vmem:[#allocation2] sm:$0xff]
        %v1562 = vld [vmem:[#allocation2 + $0x8] sm:$0xff]
        %v1563 = vld [vmem:[#allocation2 + $0x10] sm:$0xff]
        %v1564 = vld [vmem:[#allocation2 + $0x18] sm:$0xff]
        %v1565 = vmul.f32 %v1561, 0.33333334
        %v1566 = vmul.f32 %v1562, 0.33333334
        %v1567 = vmul.f32 %v1563, 0.33333334
        %v1568 = vmul.f32 %v1564, 0.33333334
        %v1569 = vld [vmem:[%s3] sm:$0xff]
        %v1570 = vld [vmem:[%s3 + $0x8] sm:$0xff]
        %v1571 = vld [vmem:[%s3 + $0x10] sm:$0xff]
        %v1572 = vld [vmem:[%s3 + $0x18] sm:$0xff]
        %v1573 = vmul.f32 %v1565, %v1569
        %v1574 = vmul.f32 %v1566, %v1570
        %v1575 = vmul.f32 %v1567, %v1571
        %v1576 = vmul.f32 %v1568, %v1572
        %v1577 = vld [vmem:[%s4] sm:$0xff]
        %v1578 = vld [vmem:[%s4 + $0x8] sm:$0xff]
        %v1579 = vld [vmem:[%s4 + $0x10] sm:$0xff]
        %v1580 = vld [vmem:[%s4 + $0x18] sm:$0xff]
        %v1581 = vadd.f32 %v1573, %v1577
        %v1582 = vadd.f32 %v1574, %v1578
        %v1583 = vadd.f32 %v1575, %v1579
        %v1584 = vadd.f32 %v1576, %v1580
        %v1585 = vld [vmem:[%s5] sm:$0xff]
        %v1586 = vld [vmem:[%s5 + $0x8] sm:$0x3]
        %v1587 = vld [vmem:[%s6] sm:$0xff]
        %v1588 = vld [vmem:[%s6 + $0x8] sm:$0x3]
        %v1590 = vsel %vm1357, %v1585, 0
        %v1593 = vsel %vm1357, %v1586, 0
        %1595 = vmatprep.subr.mxu0 0.0
        %1596 = vmatpush1.msra.mxu0 %v1581
        %1597 = vmatprep.subr.mxu0 0.0
        %1598 = vmatpush1.msra.mxu0 %v1582
        %1599 = vmatprep.subr.mxu0 0.0
        %1600 = vmatpush1.msra.mxu0 %v1583
        %1601 = vmatprep.subr.mxu0 0.0
        %1602 = vmatpush1.msra.mxu0 %v1584
        %1603 = vmatprep.subr.mxu0 0.0
        %1604 = vmatpush1.msra.mxu0 0.0
        %1605 = vmatprep.subr.mxu0 0.0
        %1606 = vmatpush1.msra.mxu0 0.0
        %1607 = vmatprep.subr.mxu0 0.0
        %1608 = vmatpush1.msra.mxu0 0.0
        %1609 = vmatprep.subr.mxu0 0.0
        %1610 = vmatpush1.msra.mxu0 0.0
        %1611 = vmatprep.subr.mxu0 0.0
        %1612 = vmatpush1.msra.mxu0 0.0
        %1613 = vmatprep.subr.mxu0 0.0
        %1614 = vmatpush1.msra.mxu0 0.0
        %1615 = vmatprep.subr.mxu0 0.0
        %1616 = vmatpush1.msra.mxu0 0.0
        %1617 = vmatprep.subr.mxu0 0.0
        %1618 = vmatpush1.msra.mxu0 0.0
        %1619 = vmatprep.subr.mxu0 0.0
        %1620 = vmatpush1.msra.mxu0 0.0
        %1621 = vmatprep.subr.mxu0 0.0
        %1622 = vmatpush1.msra.mxu0 0.0
        %1623 = vmatprep.subr.mxu0 0.0
        %1624 = vmatpush1.msra.mxu0 0.0
        %1625 = vmatprep.subr.mxu0 0.0
        %1626 = vmatpush1.msra.mxu0 0.0
        %1627 = vmatprep.subr.mxu0 0.0
        %1628 = vmatpush1.msra.mxu0 0.0
        %1629 = vmatprep.subr.mxu0 0.0
        %1630 = vmatpush1.msra.mxu0 0.0
        %1631 = vmatprep.subr.mxu0 0.0
        %1632 = vmatpush1.msra.mxu0 0.0
        %1633 = vmatprep.subr.mxu0 0.0
        %1634 = vmatpush1.msra.mxu0 0.0
        %1635 = vmatprep.subr.mxu0 0.0
        %1636 = vmatpush1.msra.mxu0 0.0
        %1637 = vmatprep.subr.mxu0 0.0
        %1638 = vmatpush1.msra.mxu0 0.0
        %1639 = vmatprep.subr.mxu0 0.0
        %1640 = vmatpush1.msra.mxu0 0.0
        %1641 = vmatprep.subr.mxu0 0.0
        %1642 = vmatpush1.msra.mxu0 0.0
        %1643 = vmatprep.subr.mxu0 0.0
        %1644 = vmatpush1.msra.mxu0 0.0
        %1645 = vmatprep.subr.mxu0 0.0
        %1646 = vmatpush1.msra.mxu0 0.0
        %1647 = vmatprep.subr.mxu0 0.0
        %1648 = vmatpush1.msra.mxu0 0.0
        %1649 = vmatprep.subr.mxu0 0.0
        %1650 = vmatpush1.msra.mxu0 0.0
        %1651 = vmatprep.subr.mxu0 0.0
        %1652 = vmatpush1.msra.mxu0 0.0
        %1653 = vmatprep.subr.mxu0 0.0
        %1654 = vmatpush1.msra.mxu0 0.0
        %1655 = vmatprep.subr.mxu0 0.0
        %1656 = vmatpush1.msra.mxu0 0.0
        %1657 = vmatprep.subr.mxu0 0.0
        %1658 = vmatpush1.msra.mxu0 0.0
        %1659 = vmatprep.mubr.f32.mxu0 0.0
        %1660 = vmatmul.mubr.f32.gmra.mrb[0].mxu0 %v1590
        %v1661 = vpop.f32.mrb[0].mxu0
        %v1662 = vadd.f32 %v1587, %v1661
        %v1663 = vpop.f32.mrb[0].mxu0
        %1664 = vmatprep.mubr.f32.mxu0 0.0
        %1665 = vmatmul.mubr.f32.gmra.mrb[0].mxu0 %v1593
        %v1666 = vpop.f32.mrb[0].mxu0
        %v1667 = vadd.f32 %v1588, %v1666
        %v1668 = vpop.f32.mrb[0].mxu0
        %1669 = vdwg.mxu0
        %1670 = vst.msk [vmem:[%s304] sm:$0xff] %vm1552, %v1662
        %vm1671 = vcmask 1024
        %1672 = vst.msk [vmem:[%s304 + $0x8] sm:$0x3] %vm1671, %v1667
      $region56: #{multiview_rgbd_forward.1} parent=47 // pred_fallthru
        _
      %p1673 = scmp.lt.s32.totalorder %s22, 1
      %s1674 = scalar_select %p1673, %s22, 1
      %s1675 = smul.addr %s1674, 2
      %s1676 = smul.addr %s1675, 8
      %s1677 = scalar_lea.vmem %s7, %s1676
      // Predicated region
      $region57: #{multiview_rgbd_forward.1} parent=47 // pred_check
        %p1678 = pneg %p202
      $region58: #{multiview_rgbd_forward.1} parent=47 // pred_check_branch
        %1680 = sbr.rel (%p1678) target = $region60
      $region59: #{multiview_rgbd_forward.1} parent=47 // pred_region
        _
      $region60: #{multiview_rgbd_forward.1} parent=47 // pred_fallthru
        _
    $region48: #{multiview_rgbd_forward.1} parent=5 // pred_fallthru
      _
    %p1681 = scmp.le.s32.totalorder 2, %s13
    // Predicated region
    $region61: #{multiview_rgbd_forward.1} parent=5 // pred_check
      %p1682 = pneg %p1681
    $region62: #{multiview_rgbd_forward.1} parent=5 // pred_check_branch
      %1684 = sbr.rel (%p1682) target = $region64
    $region63: #{multiview_rgbd_forward.1} parent=5 // pred_region
      %s1685 = ssub.s32 %s13, 2
      // Predicated region
      $region65: #{multiview_rgbd_forward.1} parent=63 // pred_check
        %p1686 = pneg %p208
      $region66: #{multiview_rgbd_forward.1} parent=63 // pred_check_branch
        %1688 = sbr.rel (%p1686) target = $region68
      $region67: #{multiview_rgbd_forward.1} parent=63 // pred_region
        %p1689 = scmp.lt.s32.totalorder %s24, 1
        %s1690 = scalar_select %p1689, %s24, 1
        %s1691 = smul.addr %s1690, 2
        %s1692 = smul.addr %s1691, 8
        %s1693 = scalar_lea.vmem %s7, %s1692
      $region68: #{multiview_rgbd_forward.1} parent=63 // pred_fallthru
        _
    $region64: #{multiview_rgbd_forward.1} parent=5 // pred_fallthru
      _
  $region6: #{multiview_rgbd_forward.1} parent=0 // loop_footer
    %s17 = sadd.s32 1, %s13
  $region7: #{multiview_rgbd_forward.1} parent=0 // loop_footer_branch
    %12 = sbr.rel target = $region3
  $region8: #{multiview_rgbd_forward.1} parent=0 // loop_exit
    _

</llo_original>
